<compile_context>
chip_gen: v6e
topology: v6e:2x2x1
jax: 0.10.0
libtpu: 0.0.40
codegen_flags: <defaults>
</compile_context>

<pallas_src>
import numpy as np
import jax
import jax.numpy as jnp
from jax import lax
from jax.experimental import pallas as pl
from jax.experimental.pallas import tpu as pltpu

_EPS = 1e-5


# --------------------------------------------------------------------------
# Fused Pallas kernel (one batch *group* per grid step; batch packed into
# the sublane axis, spatial HW lane-dense)
# --------------------------------------------------------------------------
def _make_net1_kernel(h, w):
    hw = h * w

    def conv3x3(act, w_ref, b_ref, masks_ref):
        # act      : (Cpad_in, HW) f32, batch images folded into sublanes
        # w_ref    : (Cpad_out, 9*Cpad_in) wrapper-built block weight
        # b_ref    : (Cpad_out, 1)
        # masks_ref: (9, HW) border-validity masks for padding=1
        taps = []
        for k in range(9):
            kh, kw = k // 3, k % 3
            off = (kh - 1) * w + (kw - 1)          # flat spatial offset of tap k
            if off == 0:
                taps.append(act)                   # centre tap: no shift, no mask
            else:
                # shifted[p] = act[(p + off) % HW]; mask zeroes out-of-image taps
                shifted = pltpu.roll(act, shift=(-off) % hw, axis=1)
                taps.append(shifted * masks_ref[k:k + 1, :])
        stacked = jnp.concatenate(taps, axis=0)    # (9*Cpad_in, HW), 8-aligned blocks
        # Whole conv = ONE MXU matmul (accumulation happens inside the MXU).
        out = jnp.dot(w_ref[...], stacked, preferred_element_type=jnp.float32)
        return out + b_ref[...]                    # (Cpad_out,1) broadcasts over HW

    def instnorm_relu(act, g_ref, b_ref):
        # InstanceNorm2d(affine=True), biased variance; one-pass stats so the two
        # cross-lane reductions are independent (not a serial mean->var chain).
        inv_hw = 1.0 / hw
        s1 = jnp.sum(act, axis=1, keepdims=True)
        s2 = jnp.sum(act * act, axis=1, keepdims=True)
        mean = s1 * inv_hw
        var = jnp.maximum(s2 * inv_hw - mean * mean, 0.0)
        y = (act - mean) * lax.rsqrt(var + _EPS) * g_ref[...] + b_ref[...]
        return jnp.maximum(y, 0.0)

    def kernel(x_ref, masks_ref,
               w1_ref, b1_ref, g1_ref, be1_ref,
               w2_ref, b2_ref, g2_ref, be2_ref,
               w3_ref, b3_ref, g3_ref, be3_ref,
               w4_ref, b4_ref,
               o_ref):
        a = x_ref[0]                                            # (Cpad0, HW)
        a = instnorm_relu(conv3x3(a, w1_ref, b1_ref, masks_ref), g1_ref, be1_ref)
        # dropout1: identity (eval)
        a = instnorm_relu(conv3x3(a, w2_ref, b2_ref, masks_ref), g2_ref, be2_ref)
        # dropout2: identity (eval)
        a = instnorm_relu(conv3x3(a, w3_ref, b3_ref, masks_ref), g3_ref, be3_ref)
        # dropout3: identity (eval)
        a = conv3x3(a, w4_ref, b4_ref, masks_ref)
        o_ref[0] = a.astype(o_ref.dtype)

    return kernel


# --------------------------------------------------------------------------
# Wrapper-side layout plumbing (free): masks, stacked block weights,
# batch-into-sublanes packing, 8-row alignment padding.
# --------------------------------------------------------------------------
def _round8(n):
    return ((n + 7) // 8) * 8


def _tensorcores_per_chip():
    try:
        kind = jax.devices()[0].device_kind.lower()
    except Exception:
        return 1
    return 2 if "v7" in kind else 1


def _choose_group(n, tc, max_group=8):
    """Batch elements folded into the sublane axis per grid step.

    Collapse to grid=(1,) on single-TC chips (v5e/v6e) to amortize per-step
    overhead, but keep >= tc 'parallel' grid steps on dual-TC v7x.
    """
    for g in range(min(n, max_group), 0, -1):
        if n % g == 0 and n // g >= min(tc, n):
            return g
    return 1


def _tap_masks(h, w):
    """(9, H*W) f32 validity masks for the 9 taps of a 3x3, padding=1 conv."""
    hw = h * w
    rows = np.arange(hw) // w
    cols = np.arange(hw) % w
    masks = np.zeros((9, hw), np.float32)
    for k in range(9):
        dh, dw = k // 3 - 1, k % 3 - 1
        valid = ((rows + dh >= 0) & (rows + dh < h) &
                 (cols + dw >= 0) & (cols + dw < w))
        masks[k] = valid.astype(np.float32)
    return masks


def _stacked_weight(weight, g, cpad_in, cpad_out):
    """(Cout, Cin, 3, 3) -> (cpad_out, 9*cpad_in) block matrix.

    Column order matches the in-kernel tap-major stacking of the (cpad_in, HW)
    activation (rows = image-major b*Cin + ci, pads zero); block-diagonal over
    the g batch images packed into sublanes, zero rows/cols for padding.
    """
    cout, cin = weight.shape[0], weight.shape[1]
    w_t = jnp.transpose(weight, (2, 3, 0, 1)).reshape(9, cout, cin)   # tap-major
    eye = jnp.eye(g, dtype=weight.dtype)
    blk = jnp.einsum("ab,kij->kaibj", eye, w_t).reshape(9, g * cout, g * cin)
    blk = jnp.pad(blk, ((0, 0), (0, cpad_out - g * cout), (0, cpad_in - g * cin)))
    return jnp.transpose(blk, (1, 0, 2)).reshape(cpad_out, 9 * cpad_in)


def _pad_rowvec(v, g, cpad):
    """(C,) per-channel vector -> (cpad, 1), tiled over the g packed images."""
    t = jnp.tile(v, g)
    return jnp.pad(t, (0, cpad - t.shape[0])).reshape(-1, 1)


@jax.jit
def net1_forward(params, x):
    n, cin, h, w = x.shape
    hw = h * w
    cout_final = params["conv4_w"].shape[0]

    tc = _tensorcores_per_chip()
    g = _choose_group(n, tc)
    steps = n // g

    # Channel counts through the net and their 8-aligned (batch-packed) sizes.
    chans = [cin, 2, 4, 8, cout_final]
    cpad = [_round8(g * c) for c in chans]

    # Batch-into-sublanes packing + zero-pad rows to an 8-multiple.
    x_g = x.reshape(steps, g * cin, hw)
    x_g = jnp.pad(x_g, ((0, 0), (0, cpad[0] - g * cin), (0, 0)))

    side = [jnp.asarray(_tap_masks(h, w))]
    for li in (1, 2, 3, 4):
        cpi, cpo = cpad[li - 1], cpad[li]
        side.append(_stacked_weight(params[f"conv{li}_w"], g, cpi, cpo))
        side.append(_pad_rowvec(params[f"conv{li}_b"], g, cpo))
        if li < 4:
            side.append(_pad_rowvec(params[f"norm{li}_g"], g, cpo))
            side.append(_pad_rowvec(params[f"norm{li}_b"], g, cpo))

    def full_spec(a):
        nd = a.ndim
        return pl.BlockSpec(a.shape, lambda i, _nd=nd: (0,) * _nd)

    out = pl.pallas_call(
        _make_net1_kernel(h, w),
        out_shape=jax.ShapeDtypeStruct((steps, cpad[4], hw), jnp.float32),
        grid=(steps,),
        in_specs=[pl.BlockSpec((1, cpad[0], hw), lambda i: (i, 0, 0))]
                 + [full_spec(a) for a in side],
        out_specs=pl.BlockSpec((1, cpad[4], hw), lambda i: (i, 0, 0)),
        compiler_params=pltpu.CompilerParams(
            dimension_semantics=("parallel",)),
    )(x_g, *side)

    out = out[:, :g * cout_final, :].reshape(n, cout_final, h, w)
    return out


# --------------------------------------------------------------------------
# Parameters (shapes match Net1.__init__) and pure-JAX reference
# --------------------------------------------------------------------------
def init_params(key, in_channels, out_channels):
    chans = [(in_channels, 2), (2, 4), (4, 8), (8, out_channels)]
    params = {}
    for idx, (ci, co) in enumerate(chans, start=1):
        key, kw_, kb = jax.random.split(key, 3)
        fan_in = ci * 3 * 3
        bound = 1.0 / np.sqrt(fan_in)
        params[f"conv{idx}_w"] = jax.random.uniform(
            kw_, (co, ci, 3, 3), jnp.float32, -bound, bound)
        params[f"conv{idx}_b"] = jax.random.uniform(
            kb, (co,), jnp.float32, -bound, bound)
    for idx, c in zip((1, 2, 3), (2, 4, 8)):
        params[f"norm{idx}_g"] = jnp.ones((c,), jnp.float32)   # InstanceNorm affine init
        params[f"norm{idx}_b"] = jnp.zeros((c,), jnp.float32)
    return params


def net1_reference(params, x):
    """Plain-JAX reference (conv2d + instance norm + relu, eval-mode dropout)."""
    def conv(t, w, b):
        y = lax.conv_general_dilated(
            t, w, window_strides=(1, 1), padding=((1, 1), (1, 1)),
            dimension_numbers=("NCHW", "OIHW", "NCHW"))
        return y + b.reshape(1, -1, 1, 1)

    def inorm_relu(t, g, b):
        mean = jnp.mean(t, axis=(2, 3), keepdims=True)
        var = jnp.mean((t - mean) ** 2, axis=(2, 3), keepdims=True)
        y = (t - mean) * lax.rsqrt(var + _EPS)
        y = y * g.reshape(1, -1, 1, 1) + b.reshape(1, -1, 1, 1)
        return jnp.maximum(y, 0.0)

    out = conv(x, params["conv1_w"], params["conv1_b"])
    out = inorm_relu(out, params["norm1_g"], params["norm1_b"])
    out = conv(out, params["conv2_w"], params["conv2_b"])
    out = inorm_relu(out, params["norm2_g"], params["norm2_b"])
    out = conv(out, params["conv3_w"], params["conv3_b"])
    out = inorm_relu(out, params["norm3_g"], params["norm3_b"])
    out = conv(out, params["conv4_w"], params["conv4_b"])
    return out


if __name__ == "__main__":
    in_channels, out_channels = 4, 4
    N, H, W = 2, 16, 16

    key = jax.random.PRNGKey(0)
    key, kx = jax.random.split(key)
    x = jax.random.normal(kx, (N, in_channels, H, W), jnp.float32)
    params = init_params(key, in_channels, out_channels)

    y = net1_forward(params, x)
    jax.block_until_ready(y)
    assert y.shape == (N, out_channels, H, W)

    # Correctness check against a pure-JAX reference.
    y_ref = net1_reference(params, x)
    err = float(jnp.max(jnp.abs(y - y_ref)))
    assert err < 2e-3, f"Pallas/reference mismatch: max abs err = {err}"

    print("KERNEL_OK")
</pallas_src>

<mosaic_0001>
module attributes {stable_mosaic.version = 11 : i64} {
  func.func @kernel(%arg0: i32, %arg1: memref<1x8x256xf32, #tpu.memory_space<vmem>>, %arg2: memref<9x256xf32, #tpu.memory_space<vmem>>, %arg3: memref<8x72xf32, #tpu.memory_space<vmem>>, %arg4: memref<8x1xf32, #tpu.memory_space<vmem>>, %arg5: memref<8x1xf32, #tpu.memory_space<vmem>>, %arg6: memref<8x1xf32, #tpu.memory_space<vmem>>, %arg7: memref<8x72xf32, #tpu.memory_space<vmem>>, %arg8: memref<8x1xf32, #tpu.memory_space<vmem>>, %arg9: memref<8x1xf32, #tpu.memory_space<vmem>>, %arg10: memref<8x1xf32, #tpu.memory_space<vmem>>, %arg11: memref<16x72xf32, #tpu.memory_space<vmem>>, %arg12: memref<16x1xf32, #tpu.memory_space<vmem>>, %arg13: memref<16x1xf32, #tpu.memory_space<vmem>>, %arg14: memref<16x1xf32, #tpu.memory_space<vmem>>, %arg15: memref<8x144xf32, #tpu.memory_space<vmem>>, %arg16: memref<8x1xf32, #tpu.memory_space<vmem>>, %arg17: memref<1x8x256xf32, #tpu.memory_space<vmem>>) attributes {dimension_semantics = [#tpu.dimension_semantics<parallel>], iteration_bounds = array<i64: 1>, scalar_prefetch = 0 : i64, scratch_operands = 0 : i64, tpu.core_type = #tpu.core_type<tc>, window_params = [{transform_indices = @transform_0, window_bounds = array<i64: 1, 8, 256>}, {pipeline_mode = #tpu.pipeline_mode<synchronous>, transform_indices = @transform_1, window_bounds = array<i64: 9, 256>}, {pipeline_mode = #tpu.pipeline_mode<synchronous>, transform_indices = @transform_2, window_bounds = array<i64: 8, 72>}, {pipeline_mode = #tpu.pipeline_mode<synchronous>, transform_indices = @transform_3, window_bounds = array<i64: 8, 1>}, {pipeline_mode = #tpu.pipeline_mode<synchronous>, transform_indices = @transform_4, window_bounds = array<i64: 8, 1>}, {pipeline_mode = #tpu.pipeline_mode<synchronous>, transform_indices = @transform_5, window_bounds = array<i64: 8, 1>}, {pipeline_mode = #tpu.pipeline_mode<synchronous>, transform_indices = @transform_6, window_bounds = array<i64: 8, 72>}, {pipeline_mode = #tpu.pipeline_mode<synchronous>, transform_indices = @transform_7, window_bounds = array<i64: 8, 1>}, {pipeline_mode = #tpu.pipeline_mode<synchronous>, transform_indices = @transform_8, window_bounds = array<i64: 8, 1>}, {pipeline_mode = #tpu.pipeline_mode<synchronous>, transform_indices = @transform_9, window_bounds = array<i64: 8, 1>}, {pipeline_mode = #tpu.pipeline_mode<synchronous>, transform_indices = @transform_10, window_bounds = array<i64: 16, 72>}, {pipeline_mode = #tpu.pipeline_mode<synchronous>, transform_indices = @transform_11, window_bounds = array<i64: 16, 1>}, {pipeline_mode = #tpu.pipeline_mode<synchronous>, transform_indices = @transform_12, window_bounds = array<i64: 16, 1>}, {pipeline_mode = #tpu.pipeline_mode<synchronous>, transform_indices = @transform_13, window_bounds = array<i64: 16, 1>}, {pipeline_mode = #tpu.pipeline_mode<synchronous>, transform_indices = @transform_14, window_bounds = array<i64: 8, 144>}, {pipeline_mode = #tpu.pipeline_mode<synchronous>, transform_indices = @transform_15, window_bounds = array<i64: 8, 1>}, {transform_indices = @transform_16, window_bounds = array<i64: 1, 8, 256>}]} {
    %c0 = arith.constant 0 : index
    %c0_0 = arith.constant 0 : index
    %c0_1 = arith.constant 0 : index
    %0 = vector.load %arg1[%c0, %c0_0, %c0_1] : memref<1x8x256xf32, #tpu.memory_space<vmem>>, vector<1x8x256xf32>
    %1 = vector.shape_cast %0 : vector<1x8x256xf32> to vector<8x256xf32>
    %c17_i32 = arith.constant 17 : i32
    %2 = tpu.dynamic_rotate %1 by %c17_i32 dim 1 : vector<8x256xf32>, i32 -> vector<8x256xf32>
    %c0_2 = arith.constant 0 : index
    %c0_3 = arith.constant 0 : index
    %3 = vector.load %arg2[%c0_2, %c0_3] : memref<9x256xf32, #tpu.memory_space<vmem>>, vector<1x256xf32>
    %4 = vector.broadcast %3 : vector<1x256xf32> to vector<8x256xf32>
    %5 = arith.mulf %2, %4 : vector<8x256xf32>
    %c16_i32 = arith.constant 16 : i32
    %6 = tpu.dynamic_rotate %1 by %c16_i32 dim 1 : vector<8x256xf32>, i32 -> vector<8x256xf32>
    %c1 = arith.constant 1 : index
    %c0_4 = arith.constant 0 : index
    %7 = vector.load %arg2[%c1, %c0_4] : memref<9x256xf32, #tpu.memory_space<vmem>>, vector<1x256xf32>
    %8 = vector.broadcast %7 : vector<1x256xf32> to vector<8x256xf32>
    %9 = arith.mulf %6, %8 : vector<8x256xf32>
    %c15_i32 = arith.constant 15 : i32
    %10 = tpu.dynamic_rotate %1 by %c15_i32 dim 1 : vector<8x256xf32>, i32 -> vector<8x256xf32>
    %c2 = arith.constant 2 : index
    %c0_5 = arith.constant 0 : index
    %11 = vector.load %arg2[%c2, %c0_5] : memref<9x256xf32, #tpu.memory_space<vmem>>, vector<1x256xf32>
    %12 = vector.broadcast %11 : vector<1x256xf32> to vector<8x256xf32>
    %13 = arith.mulf %10, %12 : vector<8x256xf32>
    %c1_i32 = arith.constant 1 : i32
    %14 = tpu.dynamic_rotate %1 by %c1_i32 dim 1 : vector<8x256xf32>, i32 -> vector<8x256xf32>
    %c3 = arith.constant 3 : index
    %c0_6 = arith.constant 0 : index
    %15 = vector.load %arg2[%c3, %c0_6] : memref<9x256xf32, #tpu.memory_space<vmem>>, vector<1x256xf32>
    %16 = vector.broadcast %15 : vector<1x256xf32> to vector<8x256xf32>
    %17 = arith.mulf %14, %16 : vector<8x256xf32>
    %c255_i32 = arith.constant 255 : i32
    %18 = tpu.dynamic_rotate %1 by %c255_i32 dim 1 : vector<8x256xf32>, i32 -> vector<8x256xf32>
    %c5 = arith.constant 5 : index
    %c0_7 = arith.constant 0 : index
    %19 = vector.load %arg2[%c5, %c0_7] : memref<9x256xf32, #tpu.memory_space<vmem>>, vector<1x256xf32>
    %20 = vector.broadcast %19 : vector<1x256xf32> to vector<8x256xf32>
    %21 = arith.mulf %18, %20 : vector<8x256xf32>
    %c241_i32 = arith.constant 241 : i32
    %22 = tpu.dynamic_rotate %1 by %c241_i32 dim 1 : vector<8x256xf32>, i32 -> vector<8x256xf32>
    %c6 = arith.constant 6 : index
    %c0_8 = arith.constant 0 : index
    %23 = vector.load %arg2[%c6, %c0_8] : memref<9x256xf32, #tpu.memory_space<vmem>>, vector<1x256xf32>
    %24 = vector.broadcast %23 : vector<1x256xf32> to vector<8x256xf32>
    %25 = arith.mulf %22, %24 : vector<8x256xf32>
    %c240_i32 = arith.constant 240 : i32
    %26 = tpu.dynamic_rotate %1 by %c240_i32 dim 1 : vector<8x256xf32>, i32 -> vector<8x256xf32>
    %c7 = arith.constant 7 : index
    %c0_9 = arith.constant 0 : index
    %27 = vector.load %arg2[%c7, %c0_9] : memref<9x256xf32, #tpu.memory_space<vmem>>, vector<1x256xf32>
    %28 = vector.broadcast %27 : vector<1x256xf32> to vector<8x256xf32>
    %29 = arith.mulf %26, %28 : vector<8x256xf32>
    %c239_i32 = arith.constant 239 : i32
    %30 = tpu.dynamic_rotate %1 by %c239_i32 dim 1 : vector<8x256xf32>, i32 -> vector<8x256xf32>
    %c8 = arith.constant 8 : index
    %c0_10 = arith.constant 0 : index
    %31 = vector.load %arg2[%c8, %c0_10] : memref<9x256xf32, #tpu.memory_space<vmem>>, vector<1x256xf32>
    %32 = vector.broadcast %31 : vector<1x256xf32> to vector<8x256xf32>
    %33 = arith.mulf %30, %32 : vector<8x256xf32>
    %34 = tpu.concatenate %5, %9, %13, %17, %1, %21, %25, %29, %33 in 0 : vector<8x256xf32>, vector<8x256xf32>, vector<8x256xf32>, vector<8x256xf32>, vector<8x256xf32>, vector<8x256xf32>, vector<8x256xf32>, vector<8x256xf32>, vector<8x256xf32> -> vector<72x256xf32>
    %c0_11 = arith.constant 0 : index
    %c0_12 = arith.constant 0 : index
    %35 = vector.load %arg3[%c0_11, %c0_12] : memref<8x72xf32, #tpu.memory_space<vmem>>, vector<8x72xf32>
    %cst = arith.constant dense<0.000000e+00> : vector<8x256xf32>
    %36 = tpu.matmul %35, %34, %cst {dimension_numbers = #tpu.dot_dimension_numbers<[1], [0], [0], [1], [0, 0, 1, 1], [], []>} : vector<8x72xf32>, vector<72x256xf32>, vector<8x256xf32> -> vector<8x256xf32>
    %c0_13 = arith.constant 0 : index
    %c0_14 = arith.constant 0 : index
    %37 = vector.load %arg4[%c0_13, %c0_14] : memref<8x1xf32, #tpu.memory_space<vmem>>, vector<8x1xf32>
    %38 = vector.broadcast %37 : vector<8x1xf32> to vector<8x256xf32>
    %39 = arith.addf %36, %38 : vector<8x256xf32>
    %cst_15 = arith.constant dense<0.000000e+00> : vector<8xf32>
    %40 = vector.multi_reduction <add>, %39, %cst_15 [1] : vector<8x256xf32> to vector<8xf32>
    %41 = vector.shape_cast %40 : vector<8xf32> to vector<8x1xf32>
    %42 = arith.mulf %39, %39 : vector<8x256xf32>
    %cst_16 = arith.constant dense<0.000000e+00> : vector<8xf32>
    %43 = vector.multi_reduction <add>, %42, %cst_16 [1] : vector<8x256xf32> to vector<8xf32>
    %44 = vector.shape_cast %43 : vector<8xf32> to vector<8x1xf32>
    %cst_17 = arith.constant 3.906250e-03 : f32
    %45 = vector.broadcast %cst_17 : f32 to vector<8x1xf32>
    %46 = arith.mulf %41, %45 : vector<8x1xf32>
    %cst_18 = arith.constant 3.906250e-03 : f32
    %47 = vector.broadcast %cst_18 : f32 to vector<8x1xf32>
    %48 = arith.mulf %44, %47 : vector<8x1xf32>
    %49 = arith.mulf %46, %46 : vector<8x1xf32>
    %50 = arith.subf %48, %49 : vector<8x1xf32>
    %cst_19 = arith.constant 0.000000e+00 : f32
    %51 = vector.broadcast %cst_19 : f32 to vector<8x1xf32>
    %52 = arith.maximumf %50, %51 : vector<8x1xf32>
    %53 = vector.broadcast %46 : vector<8x1xf32> to vector<8x256xf32>
    %54 = arith.subf %39, %53 : vector<8x256xf32>
    %cst_20 = arith.constant 9.99999974E-6 : f32
    %55 = vector.broadcast %cst_20 : f32 to vector<8x1xf32>
    %56 = arith.addf %52, %55 : vector<8x1xf32>
    %57 = math.rsqrt %56 : vector<8x1xf32>
    %58 = vector.broadcast %57 : vector<8x1xf32> to vector<8x256xf32>
    %59 = arith.mulf %54, %58 : vector<8x256xf32>
    %c0_21 = arith.constant 0 : index
    %c0_22 = arith.constant 0 : index
    %60 = vector.load %arg5[%c0_21, %c0_22] : memref<8x1xf32, #tpu.memory_space<vmem>>, vector<8x1xf32>
    %61 = vector.broadcast %60 : vector<8x1xf32> to vector<8x256xf32>
    %62 = arith.mulf %59, %61 : vector<8x256xf32>
    %c0_23 = arith.constant 0 : index
    %c0_24 = arith.constant 0 : index
    %63 = vector.load %arg6[%c0_23, %c0_24] : memref<8x1xf32, #tpu.memory_space<vmem>>, vector<8x1xf32>
    %64 = vector.broadcast %63 : vector<8x1xf32> to vector<8x256xf32>
    %65 = arith.addf %62, %64 : vector<8x256xf32>
    %cst_25 = arith.constant 0.000000e+00 : f32
    %66 = vector.broadcast %cst_25 : f32 to vector<8x256xf32>
    %67 = arith.maximumf %65, %66 : vector<8x256xf32>
    %c17_i32_26 = arith.constant 17 : i32
    %68 = tpu.dynamic_rotate %67 by %c17_i32_26 dim 1 : vector<8x256xf32>, i32 -> vector<8x256xf32>
    %c0_27 = arith.constant 0 : index
    %c0_28 = arith.constant 0 : index
    %69 = vector.load %arg2[%c0_27, %c0_28] : memref<9x256xf32, #tpu.memory_space<vmem>>, vector<1x256xf32>
    %70 = vector.broadcast %69 : vector<1x256xf32> to vector<8x256xf32>
    %71 = arith.mulf %68, %70 : vector<8x256xf32>
    %c16_i32_29 = arith.constant 16 : i32
    %72 = tpu.dynamic_rotate %67 by %c16_i32_29 dim 1 : vector<8x256xf32>, i32 -> vector<8x256xf32>
    %c1_30 = arith.constant 1 : index
    %c0_31 = arith.constant 0 : index
    %73 = vector.load %arg2[%c1_30, %c0_31] : memref<9x256xf32, #tpu.memory_space<vmem>>, vector<1x256xf32>
    %74 = vector.broadcast %73 : vector<1x256xf32> to vector<8x256xf32>
    %75 = arith.mulf %72, %74 : vector<8x256xf32>
    %c15_i32_32 = arith.constant 15 : i32
    %76 = tpu.dynamic_rotate %67 by %c15_i32_32 dim 1 : vector<8x256xf32>, i32 -> vector<8x256xf32>
    %c2_33 = arith.constant 2 : index
    %c0_34 = arith.constant 0 : index
    %77 = vector.load %arg2[%c2_33, %c0_34] : memref<9x256xf32, #tpu.memory_space<vmem>>, vector<1x256xf32>
    %78 = vector.broadcast %77 : vector<1x256xf32> to vector<8x256xf32>
    %79 = arith.mulf %76, %78 : vector<8x256xf32>
    %c1_i32_35 = arith.constant 1 : i32
    %80 = tpu.dynamic_rotate %67 by %c1_i32_35 dim 1 : vector<8x256xf32>, i32 -> vector<8x256xf32>
    %c3_36 = arith.constant 3 : index
    %c0_37 = arith.constant 0 : index
    %81 = vector.load %arg2[%c3_36, %c0_37] : memref<9x256xf32, #tpu.memory_space<vmem>>, vector<1x256xf32>
    %82 = vector.broadcast %81 : vector<1x256xf32> to vector<8x256xf32>
    %83 = arith.mulf %80, %82 : vector<8x256xf32>
    %c255_i32_38 = arith.constant 255 : i32
    %84 = tpu.dynamic_rotate %67 by %c255_i32_38 dim 1 : vector<8x256xf32>, i32 -> vector<8x256xf32>
    %c5_39 = arith.constant 5 : index
    %c0_40 = arith.constant 0 : index
    %85 = vector.load %arg2[%c5_39, %c0_40] : memref<9x256xf32, #tpu.memory_space<vmem>>, vector<1x256xf32>
    %86 = vector.broadcast %85 : vector<1x256xf32> to vector<8x256xf32>
    %87 = arith.mulf %84, %86 : vector<8x256xf32>
    %c241_i32_41 = arith.constant 241 : i32
    %88 = tpu.dynamic_rotate %67 by %c241_i32_41 dim 1 : vector<8x256xf32>, i32 -> vector<8x256xf32>
    %c6_42 = arith.constant 6 : index
    %c0_43 = arith.constant 0 : index
    %89 = vector.load %arg2[%c6_42, %c0_43] : memref<9x256xf32, #tpu.memory_space<vmem>>, vector<1x256xf32>
    %90 = vector.broadcast %89 : vector<1x256xf32> to vector<8x256xf32>
    %91 = arith.mulf %88, %90 : vector<8x256xf32>
    %c240_i32_44 = arith.constant 240 : i32
    %92 = tpu.dynamic_rotate %67 by %c240_i32_44 dim 1 : vector<8x256xf32>, i32 -> vector<8x256xf32>
    %c7_45 = arith.constant 7 : index
    %c0_46 = arith.constant 0 : index
    %93 = vector.load %arg2[%c7_45, %c0_46] : memref<9x256xf32, #tpu.memory_space<vmem>>, vector<1x256xf32>
    %94 = vector.broadcast %93 : vector<1x256xf32> to vector<8x256xf32>
    %95 = arith.mulf %92, %94 : vector<8x256xf32>
    %c239_i32_47 = arith.constant 239 : i32
    %96 = tpu.dynamic_rotate %67 by %c239_i32_47 dim 1 : vector<8x256xf32>, i32 -> vector<8x256xf32>
    %c8_48 = arith.constant 8 : index
    %c0_49 = arith.constant 0 : index
    %97 = vector.load %arg2[%c8_48, %c0_49] : memref<9x256xf32, #tpu.memory_space<vmem>>, vector<1x256xf32>
    %98 = vector.broadcast %97 : vector<1x256xf32> to vector<8x256xf32>
    %99 = arith.mulf %96, %98 : vector<8x256xf32>
    %100 = tpu.concatenate %71, %75, %79, %83, %67, %87, %91, %95, %99 in 0 : vector<8x256xf32>, vector<8x256xf32>, vector<8x256xf32>, vector<8x256xf32>, vector<8x256xf32>, vector<8x256xf32>, vector<8x256xf32>, vector<8x256xf32>, vector<8x256xf32> -> vector<72x256xf32>
    %c0_50 = arith.constant 0 : index
    %c0_51 = arith.constant 0 : index
    %101 = vector.load %arg7[%c0_50, %c0_51] : memref<8x72xf32, #tpu.memory_space<vmem>>, vector<8x72xf32>
    %cst_52 = arith.constant dense<0.000000e+00> : vector<8x256xf32>
    %102 = tpu.matmul %101, %100, %cst_52 {dimension_numbers = #tpu.dot_dimension_numbers<[1], [0], [0], [1], [0, 0, 1, 1], [], []>} : vector<8x72xf32>, vector<72x256xf32>, vector<8x256xf32> -> vector<8x256xf32>
    %c0_53 = arith.constant 0 : index
    %c0_54 = arith.constant 0 : index
    %103 = vector.load %arg8[%c0_53, %c0_54] : memref<8x1xf32, #tpu.memory_space<vmem>>, vector<8x1xf32>
    %104 = vector.broadcast %103 : vector<8x1xf32> to vector<8x256xf32>
    %105 = arith.addf %102, %104 : vector<8x256xf32>
    %cst_55 = arith.constant dense<0.000000e+00> : vector<8xf32>
    %106 = vector.multi_reduction <add>, %105, %cst_55 [1] : vector<8x256xf32> to vector<8xf32>
    %107 = vector.shape_cast %106 : vector<8xf32> to vector<8x1xf32>
    %108 = arith.mulf %105, %105 : vector<8x256xf32>
    %cst_56 = arith.constant dense<0.000000e+00> : vector<8xf32>
    %109 = vector.multi_reduction <add>, %108, %cst_56 [1] : vector<8x256xf32> to vector<8xf32>
    %110 = vector.shape_cast %109 : vector<8xf32> to vector<8x1xf32>
    %cst_57 = arith.constant 3.906250e-03 : f32
    %111 = vector.broadcast %cst_57 : f32 to vector<8x1xf32>
    %112 = arith.mulf %107, %111 : vector<8x1xf32>
    %cst_58 = arith.constant 3.906250e-03 : f32
    %113 = vector.broadcast %cst_58 : f32 to vector<8x1xf32>
    %114 = arith.mulf %110, %113 : vector<8x1xf32>
    %115 = arith.mulf %112, %112 : vector<8x1xf32>
    %116 = arith.subf %114, %115 : vector<8x1xf32>
    %cst_59 = arith.constant 0.000000e+00 : f32
    %117 = vector.broadcast %cst_59 : f32 to vector<8x1xf32>
    %118 = arith.maximumf %116, %117 : vector<8x1xf32>
    %119 = vector.broadcast %112 : vector<8x1xf32> to vector<8x256xf32>
    %120 = arith.subf %105, %119 : vector<8x256xf32>
    %cst_60 = arith.constant 9.99999974E-6 : f32
    %121 = vector.broadcast %cst_60 : f32 to vector<8x1xf32>
    %122 = arith.addf %118, %121 : vector<8x1xf32>
    %123 = math.rsqrt %122 : vector<8x1xf32>
    %124 = vector.broadcast %123 : vector<8x1xf32> to vector<8x256xf32>
    %125 = arith.mulf %120, %124 : vector<8x256xf32>
    %c0_61 = arith.constant 0 : index
    %c0_62 = arith.constant 0 : index
    %126 = vector.load %arg9[%c0_61, %c0_62] : memref<8x1xf32, #tpu.memory_space<vmem>>, vector<8x1xf32>
    %127 = vector.broadcast %126 : vector<8x1xf32> to vector<8x256xf32>
    %128 = arith.mulf %125, %127 : vector<8x256xf32>
    %c0_63 = arith.constant 0 : index
    %c0_64 = arith.constant 0 : index
    %129 = vector.load %arg10[%c0_63, %c0_64] : memref<8x1xf32, #tpu.memory_space<vmem>>, vector<8x1xf32>
    %130 = vector.broadcast %129 : vector<8x1xf32> to vector<8x256xf32>
    %131 = arith.addf %128, %130 : vector<8x256xf32>
    %cst_65 = arith.constant 0.000000e+00 : f32
    %132 = vector.broadcast %cst_65 : f32 to vector<8x256xf32>
    %133 = arith.maximumf %131, %132 : vector<8x256xf32>
    %c17_i32_66 = arith.constant 17 : i32
    %134 = tpu.dynamic_rotate %133 by %c17_i32_66 dim 1 : vector<8x256xf32>, i32 -> vector<8x256xf32>
    %c0_67 = arith.constant 0 : index
    %c0_68 = arith.constant 0 : index
    %135 = vector.load %arg2[%c0_67, %c0_68] : memref<9x256xf32, #tpu.memory_space<vmem>>, vector<1x256xf32>
    %136 = vector.broadcast %135 : vector<1x256xf32> to vector<8x256xf32>
    %137 = arith.mulf %134, %136 : vector<8x256xf32>
    %c16_i32_69 = arith.constant 16 : i32
    %138 = tpu.dynamic_rotate %133 by %c16_i32_69 dim 1 : vector<8x256xf32>, i32 -> vector<8x256xf32>
    %c1_70 = arith.constant 1 : index
    %c0_71 = arith.constant 0 : index
    %139 = vector.load %arg2[%c1_70, %c0_71] : memref<9x256xf32, #tpu.memory_space<vmem>>, vector<1x256xf32>
    %140 = vector.broadcast %139 : vector<1x256xf32> to vector<8x256xf32>
    %141 = arith.mulf %138, %140 : vector<8x256xf32>
    %c15_i32_72 = arith.constant 15 : i32
    %142 = tpu.dynamic_rotate %133 by %c15_i32_72 dim 1 : vector<8x256xf32>, i32 -> vector<8x256xf32>
    %c2_73 = arith.constant 2 : index
    %c0_74 = arith.constant 0 : index
    %143 = vector.load %arg2[%c2_73, %c0_74] : memref<9x256xf32, #tpu.memory_space<vmem>>, vector<1x256xf32>
    %144 = vector.broadcast %143 : vector<1x256xf32> to vector<8x256xf32>
    %145 = arith.mulf %142, %144 : vector<8x256xf32>
    %c1_i32_75 = arith.constant 1 : i32
    %146 = tpu.dynamic_rotate %133 by %c1_i32_75 dim 1 : vector<8x256xf32>, i32 -> vector<8x256xf32>
    %c3_76 = arith.constant 3 : index
    %c0_77 = arith.constant 0 : index
    %147 = vector.load %arg2[%c3_76, %c0_77] : memref<9x256xf32, #tpu.memory_space<vmem>>, vector<1x256xf32>
    %148 = vector.broadcast %147 : vector<1x256xf32> to vector<8x256xf32>
    %149 = arith.mulf %146, %148 : vector<8x256xf32>
    %c255_i32_78 = arith.constant 255 : i32
    %150 = tpu.dynamic_rotate %133 by %c255_i32_78 dim 1 : vector<8x256xf32>, i32 -> vector<8x256xf32>
    %c5_79 = arith.constant 5 : index
    %c0_80 = arith.constant 0 : index
    %151 = vector.load %arg2[%c5_79, %c0_80] : memref<9x256xf32, #tpu.memory_space<vmem>>, vector<1x256xf32>
    %152 = vector.broadcast %151 : vector<1x256xf32> to vector<8x256xf32>
    %153 = arith.mulf %150, %152 : vector<8x256xf32>
    %c241_i32_81 = arith.constant 241 : i32
    %154 = tpu.dynamic_rotate %133 by %c241_i32_81 dim 1 : vector<8x256xf32>, i32 -> vector<8x256xf32>
    %c6_82 = arith.constant 6 : index
    %c0_83 = arith.constant 0 : index
    %155 = vector.load %arg2[%c6_82, %c0_83] : memref<9x256xf32, #tpu.memory_space<vmem>>, vector<1x256xf32>
    %156 = vector.broadcast %155 : vector<1x256xf32> to vector<8x256xf32>
    %157 = arith.mulf %154, %156 : vector<8x256xf32>
    %c240_i32_84 = arith.constant 240 : i32
    %158 = tpu.dynamic_rotate %133 by %c240_i32_84 dim 1 : vector<8x256xf32>, i32 -> vector<8x256xf32>
    %c7_85 = arith.constant 7 : index
    %c0_86 = arith.constant 0 : index
    %159 = vector.load %arg2[%c7_85, %c0_86] : memref<9x256xf32, #tpu.memory_space<vmem>>, vector<1x256xf32>
    %160 = vector.broadcast %159 : vector<1x256xf32> to vector<8x256xf32>
    %161 = arith.mulf %158, %160 : vector<8x256xf32>
    %c239_i32_87 = arith.constant 239 : i32
    %162 = tpu.dynamic_rotate %133 by %c239_i32_87 dim 1 : vector<8x256xf32>, i32 -> vector<8x256xf32>
    %c8_88 = arith.constant 8 : index
    %c0_89 = arith.constant 0 : index
    %163 = vector.load %arg2[%c8_88, %c0_89] : memref<9x256xf32, #tpu.memory_space<vmem>>, vector<1x256xf32>
    %164 = vector.broadcast %163 : vector<1x256xf32> to vector<8x256xf32>
    %165 = arith.mulf %162, %164 : vector<8x256xf32>
    %166 = tpu.concatenate %137, %141, %145, %149, %133, %153, %157, %161, %165 in 0 : vector<8x256xf32>, vector<8x256xf32>, vector<8x256xf32>, vector<8x256xf32>, vector<8x256xf32>, vector<8x256xf32>, vector<8x256xf32>, vector<8x256xf32>, vector<8x256xf32> -> vector<72x256xf32>
    %c0_90 = arith.constant 0 : index
    %c0_91 = arith.constant 0 : index
    %167 = vector.load %arg11[%c0_90, %c0_91] : memref<16x72xf32, #tpu.memory_space<vmem>>, vector<16x72xf32>
    %cst_92 = arith.constant dense<0.000000e+00> : vector<16x256xf32>
    %168 = tpu.matmul %167, %166, %cst_92 {dimension_numbers = #tpu.dot_dimension_numbers<[1], [0], [0], [1], [0, 0, 1, 1], [], []>} : vector<16x72xf32>, vector<72x256xf32>, vector<16x256xf32> -> vector<16x256xf32>
    %c0_93 = arith.constant 0 : index
    %c0_94 = arith.constant 0 : index
    %169 = vector.load %arg12[%c0_93, %c0_94] : memref<16x1xf32, #tpu.memory_space<vmem>>, vector<16x1xf32>
    %170 = vector.broadcast %169 : vector<16x1xf32> to vector<16x256xf32>
    %171 = arith.addf %168, %170 : vector<16x256xf32>
    %cst_95 = arith.constant dense<0.000000e+00> : vector<16xf32>
    %172 = vector.multi_reduction <add>, %171, %cst_95 [1] : vector<16x256xf32> to vector<16xf32>
    %173 = vector.shape_cast %172 : vector<16xf32> to vector<16x1xf32>
    %174 = arith.mulf %171, %171 : vector<16x256xf32>
    %cst_96 = arith.constant dense<0.000000e+00> : vector<16xf32>
    %175 = vector.multi_reduction <add>, %174, %cst_96 [1] : vector<16x256xf32> to vector<16xf32>
    %176 = vector.shape_cast %175 : vector<16xf32> to vector<16x1xf32>
    %cst_97 = arith.constant 3.906250e-03 : f32
    %177 = vector.broadcast %cst_97 : f32 to vector<16x1xf32>
    %178 = arith.mulf %173, %177 : vector<16x1xf32>
    %cst_98 = arith.constant 3.906250e-03 : f32
    %179 = vector.broadcast %cst_98 : f32 to vector<16x1xf32>
    %180 = arith.mulf %176, %179 : vector<16x1xf32>
    %181 = arith.mulf %178, %178 : vector<16x1xf32>
    %182 = arith.subf %180, %181 : vector<16x1xf32>
    %cst_99 = arith.constant 0.000000e+00 : f32
    %183 = vector.broadcast %cst_99 : f32 to vector<16x1xf32>
    %184 = arith.maximumf %182, %183 : vector<16x1xf32>
    %185 = vector.broadcast %178 : vector<16x1xf32> to vector<16x256xf32>
    %186 = arith.subf %171, %185 : vector<16x256xf32>
    %cst_100 = arith.constant 9.99999974E-6 : f32
    %187 = vector.broadcast %cst_100 : f32 to vector<16x1xf32>
    %188 = arith.addf %184, %187 : vector<16x1xf32>
    %189 = math.rsqrt %188 : vector<16x1xf32>
    %190 = vector.broadcast %189 : vector<16x1xf32> to vector<16x256xf32>
    %191 = arith.mulf %186, %190 : vector<16x256xf32>
    %c0_101 = arith.constant 0 : index
    %c0_102 = arith.constant 0 : index
    %192 = vector.load %arg13[%c0_101, %c0_102] : memref<16x1xf32, #tpu.memory_space<vmem>>, vector<16x1xf32>
    %193 = vector.broadcast %192 : vector<16x1xf32> to vector<16x256xf32>
    %194 = arith.mulf %191, %193 : vector<16x256xf32>
    %c0_103 = arith.constant 0 : index
    %c0_104 = arith.constant 0 : index
    %195 = vector.load %arg14[%c0_103, %c0_104] : memref<16x1xf32, #tpu.memory_space<vmem>>, vector<16x1xf32>
    %196 = vector.broadcast %195 : vector<16x1xf32> to vector<16x256xf32>
    %197 = arith.addf %194, %196 : vector<16x256xf32>
    %cst_105 = arith.constant 0.000000e+00 : f32
    %198 = vector.broadcast %cst_105 : f32 to vector<16x256xf32>
    %199 = arith.maximumf %197, %198 : vector<16x256xf32>
    %c17_i32_106 = arith.constant 17 : i32
    %200 = tpu.dynamic_rotate %199 by %c17_i32_106 dim 1 : vector<16x256xf32>, i32 -> vector<16x256xf32>
    %c0_107 = arith.constant 0 : index
    %c0_108 = arith.constant 0 : index
    %201 = vector.load %arg2[%c0_107, %c0_108] : memref<9x256xf32, #tpu.memory_space<vmem>>, vector<1x256xf32>
    %202 = vector.broadcast %201 : vector<1x256xf32> to vector<16x256xf32>
    %203 = arith.mulf %200, %202 : vector<16x256xf32>
    %c16_i32_109 = arith.constant 16 : i32
    %204 = tpu.dynamic_rotate %199 by %c16_i32_109 dim 1 : vector<16x256xf32>, i32 -> vector<16x256xf32>
    %c1_110 = arith.constant 1 : index
    %c0_111 = arith.constant 0 : index
    %205 = vector.load %arg2[%c1_110, %c0_111] : memref<9x256xf32, #tpu.memory_space<vmem>>, vector<1x256xf32>
    %206 = vector.broadcast %205 : vector<1x256xf32> to vector<16x256xf32>
    %207 = arith.mulf %204, %206 : vector<16x256xf32>
    %c15_i32_112 = arith.constant 15 : i32
    %208 = tpu.dynamic_rotate %199 by %c15_i32_112 dim 1 : vector<16x256xf32>, i32 -> vector<16x256xf32>
    %c2_113 = arith.constant 2 : index
    %c0_114 = arith.constant 0 : index
    %209 = vector.load %arg2[%c2_113, %c0_114] : memref<9x256xf32, #tpu.memory_space<vmem>>, vector<1x256xf32>
    %210 = vector.broadcast %209 : vector<1x256xf32> to vector<16x256xf32>
    %211 = arith.mulf %208, %210 : vector<16x256xf32>
    %c1_i32_115 = arith.constant 1 : i32
    %212 = tpu.dynamic_rotate %199 by %c1_i32_115 dim 1 : vector<16x256xf32>, i32 -> vector<16x256xf32>
    %c3_116 = arith.constant 3 : index
    %c0_117 = arith.constant 0 : index
    %213 = vector.load %arg2[%c3_116, %c0_117] : memref<9x256xf32, #tpu.memory_space<vmem>>, vector<1x256xf32>
    %214 = vector.broadcast %213 : vector<1x256xf32> to vector<16x256xf32>
    %215 = arith.mulf %212, %214 : vector<16x256xf32>
    %c255_i32_118 = arith.constant 255 : i32
    %216 = tpu.dynamic_rotate %199 by %c255_i32_118 dim 1 : vector<16x256xf32>, i32 -> vector<16x256xf32>
    %c5_119 = arith.constant 5 : index
    %c0_120 = arith.constant 0 : index
    %217 = vector.load %arg2[%c5_119, %c0_120] : memref<9x256xf32, #tpu.memory_space<vmem>>, vector<1x256xf32>
    %218 = vector.broadcast %217 : vector<1x256xf32> to vector<16x256xf32>
    %219 = arith.mulf %216, %218 : vector<16x256xf32>
    %c241_i32_121 = arith.constant 241 : i32
    %220 = tpu.dynamic_rotate %199 by %c241_i32_121 dim 1 : vector<16x256xf32>, i32 -> vector<16x256xf32>
    %c6_122 = arith.constant 6 : index
    %c0_123 = arith.constant 0 : index
    %221 = vector.load %arg2[%c6_122, %c0_123] : memref<9x256xf32, #tpu.memory_space<vmem>>, vector<1x256xf32>
    %222 = vector.broadcast %221 : vector<1x256xf32> to vector<16x256xf32>
    %223 = arith.mulf %220, %222 : vector<16x256xf32>
    %c240_i32_124 = arith.constant 240 : i32
    %224 = tpu.dynamic_rotate %199 by %c240_i32_124 dim 1 : vector<16x256xf32>, i32 -> vector<16x256xf32>
    %c7_125 = arith.constant 7 : index
    %c0_126 = arith.constant 0 : index
    %225 = vector.load %arg2[%c7_125, %c0_126] : memref<9x256xf32, #tpu.memory_space<vmem>>, vector<1x256xf32>
    %226 = vector.broadcast %225 : vector<1x256xf32> to vector<16x256xf32>
    %227 = arith.mulf %224, %226 : vector<16x256xf32>
    %c239_i32_127 = arith.constant 239 : i32
    %228 = tpu.dynamic_rotate %199 by %c239_i32_127 dim 1 : vector<16x256xf32>, i32 -> vector<16x256xf32>
    %c8_128 = arith.constant 8 : index
    %c0_129 = arith.constant 0 : index
    %229 = vector.load %arg2[%c8_128, %c0_129] : memref<9x256xf32, #tpu.memory_space<vmem>>, vector<1x256xf32>
    %230 = vector.broadcast %229 : vector<1x256xf32> to vector<16x256xf32>
    %231 = arith.mulf %228, %230 : vector<16x256xf32>
    %232 = tpu.concatenate %203, %207, %211, %215, %199, %219, %223, %227, %231 in 0 : vector<16x256xf32>, vector<16x256xf32>, vector<16x256xf32>, vector<16x256xf32>, vector<16x256xf32>, vector<16x256xf32>, vector<16x256xf32>, vector<16x256xf32>, vector<16x256xf32> -> vector<144x256xf32>
    %c0_130 = arith.constant 0 : index
    %c0_131 = arith.constant 0 : index
    %233 = vector.load %arg15[%c0_130, %c0_131] : memref<8x144xf32, #tpu.memory_space<vmem>>, vector<8x144xf32>
    %cst_132 = arith.constant dense<0.000000e+00> : vector<8x256xf32>
    %234 = tpu.matmul %233, %232, %cst_132 {dimension_numbers = #tpu.dot_dimension_numbers<[1], [0], [0], [1], [0, 0, 1, 1], [], []>} : vector<8x144xf32>, vector<144x256xf32>, vector<8x256xf32> -> vector<8x256xf32>
    %c0_133 = arith.constant 0 : index
    %c0_134 = arith.constant 0 : index
    %235 = vector.load %arg16[%c0_133, %c0_134] : memref<8x1xf32, #tpu.memory_space<vmem>>, vector<8x1xf32>
    %236 = vector.broadcast %235 : vector<8x1xf32> to vector<8x256xf32>
    %237 = arith.addf %234, %236 : vector<8x256xf32>
    %c0_135 = arith.constant 0 : index
    %c0_136 = arith.constant 0 : index
    %c0_137 = arith.constant 0 : index
    %238 = vector.load %arg17[%c0_135, %c0_136, %c0_137] : memref<1x8x256xf32, #tpu.memory_space<vmem>>, vector<1x8x256xf32>
    %239 = vector.shape_cast %238 : vector<1x8x256xf32> to vector<8x256xf32>
    %240 = vector.shape_cast %237 : vector<8x256xf32> to vector<1x8x256xf32>
    tpu.vector_store %arg17[%c0_135, %c0_136, %c0_137], %240 {strides = array<i32>} : memref<1x8x256xf32, #tpu.memory_space<vmem>>, vector<1x8x256xf32>,
    return
  }
  func.func @transform_0(%arg0: i32) -> (i32, i32, i32) {
    %c0_i32 = arith.constant 0 : i32
    %c0_i32_0 = arith.constant 0 : i32
    %c0_i32_1 = arith.constant 0 : i32
    return %arg0, %c0_i32, %c0_i32_0 : i32, i32, i32
  }
  func.func @transform_1(%arg0: i32) -> (i32, i32) {
    %c0_i32 = arith.constant 0 : i32
    %c0_i32_0 = arith.constant 0 : i32
    %c0_i32_1 = arith.constant 0 : i32
    return %c0_i32, %c0_i32_0 : i32, i32
  }
  func.func @transform_2(%arg0: i32) -> (i32, i32) {
    %c0_i32 = arith.constant 0 : i32
    %c0_i32_0 = arith.constant 0 : i32
    %c0_i32_1 = arith.constant 0 : i32
    return %c0_i32, %c0_i32_0 : i32, i32
  }
  func.func @transform_3(%arg0: i32) -> (i32, i32) {
    %c0_i32 = arith.constant 0 : i32
    %c0_i32_0 = arith.constant 0 : i32
    %c0_i32_1 = arith.constant 0 : i32
    return %c0_i32, %c0_i32_0 : i32, i32
  }
  func.func @transform_4(%arg0: i32) -> (i32, i32) {
    %c0_i32 = arith.constant 0 : i32
    %c0_i32_0 = arith.constant 0 : i32
    %c0_i32_1 = arith.constant 0 : i32
    return %c0_i32, %c0_i32_0 : i32, i32
  }
  func.func @transform_5(%arg0: i32) -> (i32, i32) {
    %c0_i32 = arith.constant 0 : i32
    %c0_i32_0 = arith.constant 0 : i32
    %c0_i32_1 = arith.constant 0 : i32
    return %c0_i32, %c0_i32_0 : i32, i32
  }
  func.func @transform_6(%arg0: i32) -> (i32, i32) {
    %c0_i32 = arith.constant 0 : i32
    %c0_i32_0 = arith.constant 0 : i32
    %c0_i32_1 = arith.constant 0 : i32
    return %c0_i32, %c0_i32_0 : i32, i32
  }
  func.func @transform_7(%arg0: i32) -> (i32, i32) {
    %c0_i32 = arith.constant 0 : i32
    %c0_i32_0 = arith.constant 0 : i32
    %c0_i32_1 = arith.constant 0 : i32
    return %c0_i32, %c0_i32_0 : i32, i32
  }
  func.func @transform_8(%arg0: i32) -> (i32, i32) {
    %c0_i32 = arith.constant 0 : i32
    %c0_i32_0 = arith.constant 0 : i32
    %c0_i32_1 = arith.constant 0 : i32
    return %c0_i32, %c0_i32_0 : i32, i32
  }
  func.func @transform_9(%arg0: i32) -> (i32, i32) {
    %c0_i32 = arith.constant 0 : i32
    %c0_i32_0 = arith.constant 0 : i32
    %c0_i32_1 = arith.constant 0 : i32
    return %c0_i32, %c0_i32_0 : i32, i32
  }
  func.func @transform_10(%arg0: i32) -> (i32, i32) {
    %c0_i32 = arith.constant 0 : i32
    %c0_i32_0 = arith.constant 0 : i32
    %c0_i32_1 = arith.constant 0 : i32
    return %c0_i32, %c0_i32_0 : i32, i32
  }
  func.func @transform_11(%arg0: i32) -> (i32, i32) {
    %c0_i32 = arith.constant 0 : i32
    %c0_i32_0 = arith.constant 0 : i32
    %c0_i32_1 = arith.constant 0 : i32
    return %c0_i32, %c0_i32_0 : i32, i32
  }
  func.func @transform_12(%arg0: i32) -> (i32, i32) {
    %c0_i32 = arith.constant 0 : i32
    %c0_i32_0 = arith.constant 0 : i32
    %c0_i32_1 = arith.constant 0 : i32
    return %c0_i32, %c0_i32_0 : i32, i32
  }
  func.func @transform_13(%arg0: i32) -> (i32, i32) {
    %c0_i32 = arith.constant 0 : i32
    %c0_i32_0 = arith.constant 0 : i32
    %c0_i32_1 = arith.constant 0 : i32
    return %c0_i32, %c0_i32_0 : i32, i32
  }
  func.func @transform_14(%arg0: i32) -> (i32, i32) {
    %c0_i32 = arith.constant 0 : i32
    %c0_i32_0 = arith.constant 0 : i32
    %c0_i32_1 = arith.constant 0 : i32
    return %c0_i32, %c0_i32_0 : i32, i32
  }
  func.func @transform_15(%arg0: i32) -> (i32, i32) {
    %c0_i32 = arith.constant 0 : i32
    %c0_i32_0 = arith.constant 0 : i32
    %c0_i32_1 = arith.constant 0 : i32
    return %c0_i32, %c0_i32_0 : i32, i32
  }
  func.func @transform_16(%arg0: i32) -> (i32, i32, i32) {
    %c0_i32 = arith.constant 0 : i32
    %c0_i32_0 = arith.constant 0 : i32
    %c0_i32_1 = arith.constant 0 : i32
    return %arg0, %c0_i32, %c0_i32_0 : i32, i32, i32
  }
}

</mosaic_0001>

<llo_original>
// kernel: tile.83
$region0: #{tile.83}
  #allocation0 [shape = 's32[1]{0}', space=sflag, size = 0x4, scoped, tag = 'scoped memory for tile.83']
  %s0 = inlined_call_operand.vmem [shape: f32[8], index: 0, kind: input, shape index: {}]
  %s1 = inlined_call_operand.vmem [shape: f32[2,8], index: 1, kind: output, shape index: {}]
  // Predicated region
  $region2: #{tile.83} parent=0 // pred_check
    _
  $region3: #{tile.83} parent=0 // pred_check_branch
    %3 = sbr.rel (0) target = $region5
  $region4: #{tile.83} parent=0 // pred_region
    _
  $region5: #{tile.83} parent=0 // pred_fallthru
    _
  %v4 = vld [vmem:[%s0] ss:$0 sm:$0xff]
  %5 = vst [vmem:[%s1] sm:$0x3] %v4

// kernel: tile.53
$region0: #{tile.53}
  #allocation0 [shape = 's32[1]{0}', space=sflag, size = 0x4, scoped, tag = 'scoped memory for tile.53']
  %s0 = inlined_call_operand.vmem [shape: f32[2], index: 0, kind: input, shape index: {}]
  %s1 = inlined_call_operand.vmem [shape: f32[2,2], index: 1, kind: output, shape index: {}]
  // Predicated region
  $region2: #{tile.53} parent=0 // pred_check
    _
  $region3: #{tile.53} parent=0 // pred_check_branch
    %3 = sbr.rel (0) target = $region5
  $region4: #{tile.53} parent=0 // pred_region
    _
  $region5: #{tile.53} parent=0 // pred_fallthru
    _
  %v4 = vld [vmem:[%s0] ss:$0 sm:$0xff]
  %5 = vst [vmem:[%s1] sm:$0x3] %v4

// kernel: tile.54
$region0: #{tile.54}
  %s0 = inlined_call_operand.vmem [shape: f32[2,2], index: 0, kind: input, shape index: {}]
  %s1 = inlined_call_operand.vmem [shape: f32[4], index: 1, kind: output, shape index: {}]
  $region1: #{tile.54} parent=0
    #allocation0 [shape = 'u8[4096]{0}', space=vmem, size = 0x1000, scoped, tag = 'scoped mem for output reshape']
    #allocation1 [shape = 'u8[4096]{0}', space=vmem, size = 0x1000, scoped, tag = 'scoped mem for input reshape']
    %s3 = sshll.u32 1, 2
    %s4 = ssub.s32 %s3, 1
    %v5 = vld [vmem:[%s0] sm:%s4]
    %6 = vst [vmem:[#allocation1] sm:%s4] %v5
    %v7 = vld [vmem:[#allocation1] sm:$0x1]
    %vm8 = vcmask 15360
    %9 = vst.msk [vmem:[#allocation0] sm:$0x1] %vm8, %v7
    %s10 = scalar_lea.vmem [#allocation1], 1
    %v11 = vld [vmem:[%s10] sm:$0x1]
    %12 = vrot.lane.b32.xlu0 %v11, 2
    %v13 = vpop.permute.xlu0 %12
    %vm14 = vcmask 31760
    %15 = vst.msk [vmem:[#allocation0] sm:$0x1] %vm14, %v13
    %s17 = sshll.u32 1, 1
    %s18 = ssub.s32 %s17, 1
    %v20 = vld [vmem:[#allocation0] sm:%s18]
    %s21 = sshll.u32 1, 1
    %s22 = ssub.s32 %s21, 1
    %23 = vst [vmem:[%s1] sm:%s22] %v20

// kernel: tile.68
$region0: #{tile.68}
  #allocation0 [shape = 's32[1]{0}', space=sflag, size = 0x4, scoped, tag = 'scoped memory for tile.68']
  %s0 = inlined_call_operand.vmem [shape: f32[4], index: 0, kind: input, shape index: {}]
  %s1 = inlined_call_operand.vmem [shape: f32[2,4], index: 1, kind: output, shape index: {}]
  // Predicated region
  $region2: #{tile.68} parent=0 // pred_check
    _
  $region3: #{tile.68} parent=0 // pred_check_branch
    %3 = sbr.rel (0) target = $region5
  $region4: #{tile.68} parent=0 // pred_region
    _
  $region5: #{tile.68} parent=0 // pred_fallthru
    _
  %v4 = vld [vmem:[%s0] ss:$0 sm:$0xff]
  %5 = vst [vmem:[%s1] sm:$0x3] %v4

// kernel: net1_forward.1
$region0: #{net1_forward.1}
  #allocation0 [shape = 'u32[]', space=smem, size = 0x4, offset = 0x4, fixed_abs, tag = 'smem constant byte address 0x4 - core index']
  #allocation1 [shape = 'u32[144,128]{1,0:T(1,128)}', space=vmem, size = 0x12000, scoped, tag = 'internal scratch']
  %s0 = inlined_call_operand.vmem [shape: f32[1,8,256], index: 0, kind: input, shape index: {}]
  %s1 = inlined_call_operand.vmem [shape: f32[9,256], index: 1, kind: input, shape index: {}]
  %s2 = inlined_call_operand.vmem [shape: f32[8,72], index: 2, kind: input, shape index: {}]
  %s3 = inlined_call_operand.vmem [shape: f32[8,1], index: 3, kind: input, shape index: {}]
  %s4 = inlined_call_operand.vmem [shape: f32[8,1], index: 4, kind: input, shape index: {}]
  %s5 = inlined_call_operand.vmem [shape: f32[8,1], index: 5, kind: input, shape index: {}]
  %s6 = inlined_call_operand.vmem [shape: f32[8,72], index: 6, kind: input, shape index: {}]
  %s7 = inlined_call_operand.vmem [shape: f32[8,1], index: 7, kind: input, shape index: {}]
  %s8 = inlined_call_operand.vmem [shape: f32[8,1], index: 8, kind: input, shape index: {}]
  %s9 = inlined_call_operand.vmem [shape: f32[8,1], index: 9, kind: input, shape index: {}]
  %s10 = inlined_call_operand.vmem [shape: f32[16,72], index: 10, kind: input, shape index: {}]
  %s11 = inlined_call_operand.vmem [shape: f32[16,1], index: 11, kind: input, shape index: {}]
  %s12 = inlined_call_operand.vmem [shape: f32[16,1], index: 12, kind: input, shape index: {}]
  %s13 = inlined_call_operand.vmem [shape: f32[16,1], index: 13, kind: input, shape index: {}]
  %s14 = inlined_call_operand.vmem [shape: f32[8,144], index: 14, kind: input, shape index: {}]
  %s15 = inlined_call_operand.vmem [shape: f32[8,1], index: 15, kind: input, shape index: {}]
  %s16 = inlined_call_operand.vmem [shape: f32[1,8,256], index: 16, kind: output, shape index: {}]
  %s17 = sld [smem:[#allocation0]]
  $region74: #{net1_forward.1} parent=0
    _
  %s19 = ssub.s32 1, %s17
  %s20 = scalar_select 0, %s19, %s17
  // Predicated region
  $region2: #{net1_forward.1} parent=0 // pred_check
    _
  $region3: #{net1_forward.1} parent=0 // pred_check_branch
    %22 = sbr.rel (0) target = $region5
  $region4: #{net1_forward.1} parent=0 // pred_region
    _
  $region5: #{net1_forward.1} parent=0 // pred_fallthru
    _
  // Predicated region
  $region6: #{net1_forward.1} parent=0 // pred_check
    _
  $region7: #{net1_forward.1} parent=0 // pred_check_branch
    %24 = sbr.rel (0) target = $region9
  $region8: #{net1_forward.1} parent=0 // pred_region
    _
  $region9: #{net1_forward.1} parent=0 // pred_fallthru
    _
  // Predicated region
  $region10: #{net1_forward.1} parent=0 // pred_check
    _
  $region11: #{net1_forward.1} parent=0 // pred_check_branch
    %26 = sbr.rel (0) target = $region13
  $region12: #{net1_forward.1} parent=0 // pred_region
    _
  $region13: #{net1_forward.1} parent=0 // pred_fallthru
    _
  // Predicated region
  $region14: #{net1_forward.1} parent=0 // pred_check
    _
  $region15: #{net1_forward.1} parent=0 // pred_check_branch
    %28 = sbr.rel (0) target = $region17
  $region16: #{net1_forward.1} parent=0 // pred_region
    _
  $region17: #{net1_forward.1} parent=0 // pred_fallthru
    _
  // Predicated region
  $region18: #{net1_forward.1} parent=0 // pred_check
    _
  $region19: #{net1_forward.1} parent=0 // pred_check_branch
    %30 = sbr.rel (0) target = $region21
  $region20: #{net1_forward.1} parent=0 // pred_region
    _
  $region21: #{net1_forward.1} parent=0 // pred_fallthru
    _
  // Predicated region
  $region22: #{net1_forward.1} parent=0 // pred_check
    _
  $region23: #{net1_forward.1} parent=0 // pred_check_branch
    %32 = sbr.rel (0) target = $region25
  $region24: #{net1_forward.1} parent=0 // pred_region
    _
  $region25: #{net1_forward.1} parent=0 // pred_fallthru
    _
  // Predicated region
  $region26: #{net1_forward.1} parent=0 // pred_check
    _
  $region27: #{net1_forward.1} parent=0 // pred_check_branch
    %34 = sbr.rel (0) target = $region29
  $region28: #{net1_forward.1} parent=0 // pred_region
    _
  $region29: #{net1_forward.1} parent=0 // pred_fallthru
    _
  // Predicated region
  $region30: #{net1_forward.1} parent=0 // pred_check
    _
  $region31: #{net1_forward.1} parent=0 // pred_check_branch
    %36 = sbr.rel (0) target = $region33
  $region32: #{net1_forward.1} parent=0 // pred_region
    _
  $region33: #{net1_forward.1} parent=0 // pred_fallthru
    _
  // Predicated region
  $region34: #{net1_forward.1} parent=0 // pred_check
    _
  $region35: #{net1_forward.1} parent=0 // pred_check_branch
    %38 = sbr.rel (0) target = $region37
  $region36: #{net1_forward.1} parent=0 // pred_region
    _
  $region37: #{net1_forward.1} parent=0 // pred_fallthru
    _
  // Predicated region
  $region38: #{net1_forward.1} parent=0 // pred_check
    _
  $region39: #{net1_forward.1} parent=0 // pred_check_branch
    %40 = sbr.rel (0) target = $region41
  $region40: #{net1_forward.1} parent=0 // pred_region
    _
  $region41: #{net1_forward.1} parent=0 // pred_fallthru
    _
  // Predicated region
  $region42: #{net1_forward.1} parent=0 // pred_check
    _
  $region43: #{net1_forward.1} parent=0 // pred_check_branch
    %42 = sbr.rel (0) target = $region45
  $region44: #{net1_forward.1} parent=0 // pred_region
    _
  $region45: #{net1_forward.1} parent=0 // pred_fallthru
    _
  // Predicated region
  $region46: #{net1_forward.1} parent=0 // pred_check
    _
  $region47: #{net1_forward.1} parent=0 // pred_check_branch
    %44 = sbr.rel (0) target = $region49
  $region48: #{net1_forward.1} parent=0 // pred_region
    _
  $region49: #{net1_forward.1} parent=0 // pred_fallthru
    _
  // Predicated region
  $region50: #{net1_forward.1} parent=0 // pred_check
    _
  $region51: #{net1_forward.1} parent=0 // pred_check_branch
    %46 = sbr.rel (0) target = $region53
  $region52: #{net1_forward.1} parent=0 // pred_region
    _
  $region53: #{net1_forward.1} parent=0 // pred_fallthru
    _
  // Predicated region
  $region54: #{net1_forward.1} parent=0 // pred_check
    _
  $region55: #{net1_forward.1} parent=0 // pred_check_branch
    %48 = sbr.rel (0) target = $region57
  $region56: #{net1_forward.1} parent=0 // pred_region
    _
  $region57: #{net1_forward.1} parent=0 // pred_fallthru
    _
  // Predicated region
  $region58: #{net1_forward.1} parent=0 // pred_check
    _
  $region59: #{net1_forward.1} parent=0 // pred_check_branch
    %50 = sbr.rel (0) target = $region61
  $region60: #{net1_forward.1} parent=0 // pred_region
    _
  $region61: #{net1_forward.1} parent=0 // pred_fallthru
    _
  // Predicated region
  $region62: #{net1_forward.1} parent=0 // pred_check
    _
  $region63: #{net1_forward.1} parent=0 // pred_check_branch
    %52 = sbr.rel (0) target = $region65
  $region64: #{net1_forward.1} parent=0 // pred_region
    _
  $region65: #{net1_forward.1} parent=0 // pred_fallthru
    _
  %v53 = vld [vmem:[%s0] sm:$0xff]
  %v54 = vld [vmem:[%s0 + $0x8] sm:$0xff]
  %55 = vrot.lane.b32.xlu0 %v53, 17
  %v56 = vpop.permute.xlu0 %55
  %57 = vrot.lane.b32.xlu0 %v54, 17
  %v58 = vpop.permute.xlu0 %57
  %v59 = vlaneseq
  %v60 = vand.u32 %v59, 127
  %vm61 = vcmp.lt.s32.totalorder %v60, 17
  %v62 = vsel %vm61, %v56, %v58
  %v63 = vsel %vm61, %v58, %v56
  %v64 = vld [vmem:[%s1] ss:$8 sm:$0x3]
  %v66 = vlaneseq
  %v67 = vshrl.u32 %v66, 7
  %v68 = vsub.s32 0, %v67
  %v69 = vrot.slane %v64, %v68
  %v70 = vlaneseq
  %v71 = vshrl.u32 %v70, 7
  %v72 = vsub.s32 1, %v71
  %v73 = vrot.slane %v64, %v72
  %v76 = vmul.f32 %v63, %v69
  %v77 = vmul.f32 %v62, %v73
  %78 = vrot.lane.b32.xlu0 %v53, 16
  %v79 = vpop.permute.xlu0 %78
  %80 = vrot.lane.b32.xlu0 %v54, 16
  %v81 = vpop.permute.xlu0 %80
  %vm82 = vcmp.lt.s32.totalorder %v60, 16
  %v83 = vsel %vm82, %v79, %v81
  %v84 = vsel %vm82, %v81, %v79
  %s85 = scalar_lea.vmem %s1, 1
  %v86 = vld [vmem:[%s85] ss:$8 sm:$0x3]
  %v88 = vlaneseq
  %v89 = vshrl.u32 %v88, 7
  %v90 = vsub.s32 0, %v89
  %v91 = vrot.slane %v86, %v90
  %v92 = vlaneseq
  %v93 = vshrl.u32 %v92, 7
  %v94 = vsub.s32 1, %v93
  %v95 = vrot.slane %v86, %v94
  %v98 = vmul.f32 %v84, %v91
  %v99 = vmul.f32 %v83, %v95
  %100 = vrot.lane.b32.xlu0 %v53, 15
  %v101 = vpop.permute.xlu0 %100
  %102 = vrot.lane.b32.xlu0 %v54, 15
  %v103 = vpop.permute.xlu0 %102
  %vm104 = vcmp.lt.s32.totalorder %v60, 15
  %v105 = vsel %vm104, %v101, %v103
  %v106 = vsel %vm104, %v103, %v101
  %s107 = scalar_lea.vmem %s1, 2
  %v108 = vld [vmem:[%s107] ss:$8 sm:$0x3]
  %v110 = vlaneseq
  %v111 = vshrl.u32 %v110, 7
  %v112 = vsub.s32 0, %v111
  %v113 = vrot.slane %v108, %v112
  %v114 = vlaneseq
  %v115 = vshrl.u32 %v114, 7
  %v116 = vsub.s32 1, %v115
  %v117 = vrot.slane %v108, %v116
  %v120 = vmul.f32 %v106, %v113
  %v121 = vmul.f32 %v105, %v117
  %122 = vrot.lane.b32.xlu0 %v53, 1
  %v123 = vpop.permute.xlu0 %122
  %124 = vrot.lane.b32.xlu0 %v54, 1
  %v125 = vpop.permute.xlu0 %124
  %vm126 = vcmp.lt.s32.totalorder %v60, 1
  %v127 = vsel %vm126, %v123, %v125
  %v128 = vsel %vm126, %v125, %v123
  %s129 = scalar_lea.vmem %s1, 3
  %v130 = vld [vmem:[%s129] ss:$8 sm:$0x3]
  %v132 = vlaneseq
  %v133 = vshrl.u32 %v132, 7
  %v134 = vsub.s32 0, %v133
  %v135 = vrot.slane %v130, %v134
  %v136 = vlaneseq
  %v137 = vshrl.u32 %v136, 7
  %v138 = vsub.s32 1, %v137
  %v139 = vrot.slane %v130, %v138
  %v142 = vmul.f32 %v128, %v135
  %v143 = vmul.f32 %v127, %v139
  %144 = vrot.lane.b32.xlu0 %v53, 127
  %v145 = vpop.permute.xlu0 %144
  %146 = vrot.lane.b32.xlu0 %v54, 127
  %v147 = vpop.permute.xlu0 %146
  %vm148 = vcmp.lt.s32.totalorder %v60, 127
  %v149 = vsel %vm148, %v145, %v147
  %v150 = vsel %vm148, %v147, %v145
  %s151 = scalar_lea.vmem %s1, 5
  %v152 = vld [vmem:[%s151] ss:$8 sm:$0x3]
  %v154 = vlaneseq
  %v155 = vshrl.u32 %v154, 7
  %v156 = vsub.s32 0, %v155
  %v157 = vrot.slane %v152, %v156
  %v158 = vlaneseq
  %v159 = vshrl.u32 %v158, 7
  %v160 = vsub.s32 1, %v159
  %v161 = vrot.slane %v152, %v160
  %v164 = vmul.f32 %v149, %v157
  %v165 = vmul.f32 %v150, %v161
  %166 = vrot.lane.b32.xlu0 %v53, 113
  %v167 = vpop.permute.xlu0 %166
  %168 = vrot.lane.b32.xlu0 %v54, 113
  %v169 = vpop.permute.xlu0 %168
  %vm170 = vcmp.lt.s32.totalorder %v60, 113
  %v171 = vsel %vm170, %v167, %v169
  %v172 = vsel %vm170, %v169, %v167
  %s173 = scalar_lea.vmem %s1, 6
  %v174 = vld [vmem:[%s173] ss:$8 sm:$0x3]
  %v176 = vlaneseq
  %v177 = vshrl.u32 %v176, 7
  %v178 = vsub.s32 0, %v177
  %v179 = vrot.slane %v174, %v178
  %v180 = vlaneseq
  %v181 = vshrl.u32 %v180, 7
  %v182 = vsub.s32 1, %v181
  %v183 = vrot.slane %v174, %v182
  %v186 = vmul.f32 %v171, %v179
  %v187 = vmul.f32 %v172, %v183
  %188 = vrot.lane.b32.xlu0 %v53, 112
  %v189 = vpop.permute.xlu0 %188
  %190 = vrot.lane.b32.xlu0 %v54, 112
  %v191 = vpop.permute.xlu0 %190
  %vm192 = vcmp.lt.s32.totalorder %v60, 112
  %v193 = vsel %vm192, %v189, %v191
  %v194 = vsel %vm192, %v191, %v189
  %s195 = scalar_lea.vmem %s1, 7
  %v196 = vld [vmem:[%s195] ss:$8 sm:$0x3]
  %v198 = vlaneseq
  %v199 = vshrl.u32 %v198, 7
  %v200 = vsub.s32 0, %v199
  %v201 = vrot.slane %v196, %v200
  %v202 = vlaneseq
  %v203 = vshrl.u32 %v202, 7
  %v204 = vsub.s32 1, %v203
  %v205 = vrot.slane %v196, %v204
  %v208 = vmul.f32 %v193, %v201
  %v209 = vmul.f32 %v194, %v205
  %210 = vrot.lane.b32.xlu0 %v53, 111
  %v211 = vpop.permute.xlu0 %210
  %212 = vrot.lane.b32.xlu0 %v54, 111
  %v213 = vpop.permute.xlu0 %212
  %vm214 = vcmp.lt.s32.totalorder %v60, 111
  %v215 = vsel %vm214, %v211, %v213
  %v216 = vsel %vm214, %v213, %v211
  %s217 = scalar_lea.vmem %s1, 16
  %v218 = vld [vmem:[%s217] ss:$8 sm:$0x3]
  %v220 = vlaneseq
  %v221 = vshrl.u32 %v220, 7
  %v222 = vsub.s32 0, %v221
  %v223 = vrot.slane %v218, %v222
  %v224 = vlaneseq
  %v225 = vshrl.u32 %v224, 7
  %v226 = vsub.s32 1, %v225
  %v227 = vrot.slane %v218, %v226
  %v230 = vmul.f32 %v215, %v223
  %v231 = vmul.f32 %v216, %v227
  %v232 = vld [vmem:[%s2] sm:$0xff]
  %v233 = vld [vmem:[%s3] sm:$0xff]
  %235 = vset.pattern.permute.xlu0 0
  %236 = vperm.xlu0 %235, %v233
  %v237 = vpop.permute.xlu0 %236
  %vm239 = vcmask 588800
  %v241 = vsel %vm239, %v232, 0
  %243 = vmatprep.subr.mxu0 0.0
  %244 = vmatpush1.msra.mxu0 0.0
  %245 = vmatprep.subr.mxu0 0.0
  %246 = vmatpush1.msra.mxu0 0.0
  %247 = vmatprep.subr.mxu0 0.0
  %248 = vmatpush1.msra.mxu0 0.0
  %249 = vmatprep.subr.mxu0 0.0
  %250 = vmatpush1.msra.mxu0 0.0
  %251 = vmatprep.subr.mxu0 0.0
  %252 = vmatpush1.msra.mxu0 0.0
  %253 = vmatprep.subr.mxu0 0.0
  %254 = vmatpush1.msra.mxu0 0.0
  %255 = vmatprep.subr.mxu0 0.0
  %256 = vmatpush1.msra.mxu0 0.0
  %257 = vmatprep.subr.mxu0 %v231
  %258 = vmatpush1.msra.mxu0 %v230
  %259 = vmatprep.subr.mxu0 %v209
  %260 = vmatpush1.msra.mxu0 %v208
  %261 = vmatprep.subr.mxu0 %v187
  %262 = vmatpush1.msra.mxu0 %v186
  %263 = vmatprep.subr.mxu0 %v165
  %264 = vmatpush1.msra.mxu0 %v164
  %265 = vmatprep.subr.mxu0 %v54
  %266 = vmatpush1.msra.mxu0 %v53
  %267 = vmatprep.subr.mxu0 %v143
  %268 = vmatpush1.msra.mxu0 %v142
  %269 = vmatprep.subr.mxu0 %v121
  %270 = vmatpush1.msra.mxu0 %v120
  %271 = vmatprep.subr.mxu0 %v99
  %272 = vmatpush1.msra.mxu0 %v98
  %273 = vmatprep.subr.mxu0 %v77
  %274 = vmatpush1.msra.mxu0 %v76
  %275 = vmatprep.subr.mxu0 0.0
  %276 = vmatpush2.msra.mxu0 0.0
  %277 = vmatprep.subr.mxu0 0.0
  %278 = vmatpush2.msra.mxu0 0.0
  %279 = vmatprep.subr.mxu0 0.0
  %280 = vmatpush2.msra.mxu0 0.0
  %281 = vmatprep.subr.mxu0 0.0
  %282 = vmatpush2.msra.mxu0 0.0
  %283 = vmatprep.subr.mxu0 0.0
  %284 = vmatpush2.msra.mxu0 0.0
  %285 = vmatprep.subr.mxu0 0.0
  %286 = vmatpush2.msra.mxu0 0.0
  %287 = vmatprep.subr.mxu0 0.0
  %288 = vmatpush2.msra.mxu0 0.0
  %289 = vmatprep.subr.mxu0 0.0
  %290 = vmatpush2.msra.mxu0 0.0
  %291 = vmatprep.subr.mxu0 0.0
  %292 = vmatpush2.msra.mxu0 0.0
  %293 = vmatprep.subr.mxu0 0.0
  %294 = vmatpush2.msra.mxu0 0.0
  %295 = vmatprep.subr.mxu0 0.0
  %296 = vmatpush2.msra.mxu0 0.0
  %297 = vmatprep.subr.mxu0 0.0
  %298 = vmatpush2.msra.mxu0 0.0
  %299 = vmatprep.subr.mxu0 0.0
  %300 = vmatpush2.msra.mxu0 0.0
  %301 = vmatprep.subr.mxu0 0.0
  %302 = vmatpush2.msra.mxu0 0.0
  %303 = vmatprep.subr.mxu0 0.0
  %304 = vmatpush2.msra.mxu0 0.0
  %305 = vmatprep.subr.mxu0 0.0
  %306 = vmatpush2.msra.mxu0 0.0
  %307 = vmatprep.mubr.f32.mxu0 0.0
  %308 = vmatmul.mubr.f32.gmra.mxu0 %v241
  %v309 = vpop.f32.mrf.mxu0
  %v310 = vadd.f32 %v237, %v309
  %v311 = vpop.f32.mrf.mxu0
  %v312 = vadd.f32 %v237, %v311
  %313 = vdwg.mxu0
  %v314 = vadd.f32 %v310, %v312
  %315 = vadd.xlane.f32.xlu0 %v314
  %v316 = vpop.xlane.xlu0 %315
  %v317 = vmul.f32 %v310, %v310
  %v318 = vmul.f32 %v312, %v312
  %v319 = vadd.f32 %v317, %v318
  %320 = vadd.xlane.f32.xlu0 %v319
  %v321 = vpop.xlane.xlu0 %320
  %v322 = vmul.f32 %v316, 0.00390625
  %v323 = vmul.f32 %v321, 0.00390625
  %v324 = vmul.f32 %v322, %v322
  %v325 = vsub.f32 %v323, %v324
  %v326 = vmax.f32 %v325, 0.0
  %v327 = vsub.f32 %v310, %v322
  %v328 = vsub.f32 %v312, %v322
  %v329 = vadd.f32 %v326, 1e-05
  %v330 = vrsqrt.pop %v329
  %v331 = vmul.f32 %v327, %v330
  %v332 = vmul.f32 %v328, %v330
  %v333 = vld [vmem:[%s4] sm:$0xff]
  %335 = vset.pattern.permute.xlu0 0
  %336 = vperm.xlu0 %335, %v333
  %v337 = vpop.permute.xlu0 %336
  %v339 = vmul.f32 %v331, %v337
  %v340 = vmul.f32 %v332, %v337
  %v341 = vld [vmem:[%s5] sm:$0xff]
  %343 = vset.pattern.permute.xlu0 0
  %344 = vperm.xlu0 %343, %v341
  %v345 = vpop.permute.xlu0 %344
  %v347 = vadd.f32 %v339, %v345
  %v348 = vadd.f32 %v340, %v345
  %v349 = vmax.f32 %v347, 0.0
  %v350 = vmax.f32 %v348, 0.0
  %351 = vrot.lane.b32.xlu0 %v349, 17
  %v352 = vpop.permute.xlu0 %351
  %353 = vrot.lane.b32.xlu0 %v350, 17
  %v354 = vpop.permute.xlu0 %353
  %v355 = vsel %vm61, %v352, %v354
  %v356 = vsel %vm61, %v354, %v352
  %v357 = vmul.f32 %v356, %v69
  %v358 = vmul.f32 %v355, %v73
  %359 = vrot.lane.b32.xlu0 %v349, 16
  %v360 = vpop.permute.xlu0 %359
  %361 = vrot.lane.b32.xlu0 %v350, 16
  %v362 = vpop.permute.xlu0 %361
  %v363 = vsel %vm82, %v360, %v362
  %v364 = vsel %vm82, %v362, %v360
  %v365 = vmul.f32 %v364, %v91
  %v366 = vmul.f32 %v363, %v95
  %367 = vrot.lane.b32.xlu0 %v349, 15
  %v368 = vpop.permute.xlu0 %367
  %369 = vrot.lane.b32.xlu0 %v350, 15
  %v370 = vpop.permute.xlu0 %369
  %v371 = vsel %vm104, %v368, %v370
  %v372 = vsel %vm104, %v370, %v368
  %v373 = vmul.f32 %v372, %v113
  %v374 = vmul.f32 %v371, %v117
  %375 = vrot.lane.b32.xlu0 %v349, 1
  %v376 = vpop.permute.xlu0 %375
  %377 = vrot.lane.b32.xlu0 %v350, 1
  %v378 = vpop.permute.xlu0 %377
  %v379 = vsel %vm126, %v376, %v378
  %v380 = vsel %vm126, %v378, %v376
  %v381 = vmul.f32 %v380, %v135
  %v382 = vmul.f32 %v379, %v139
  %383 = vrot.lane.b32.xlu0 %v349, 127
  %v384 = vpop.permute.xlu0 %383
  %385 = vrot.lane.b32.xlu0 %v350, 127
  %v386 = vpop.permute.xlu0 %385
  %v387 = vsel %vm148, %v384, %v386
  %v388 = vsel %vm148, %v386, %v384
  %v389 = vmul.f32 %v387, %v157
  %v390 = vmul.f32 %v388, %v161
  %391 = vrot.lane.b32.xlu0 %v349, 113
  %v392 = vpop.permute.xlu0 %391
  %393 = vrot.lane.b32.xlu0 %v350, 113
  %v394 = vpop.permute.xlu0 %393
  %v395 = vsel %vm170, %v392, %v394
  %v396 = vsel %vm170, %v394, %v392
  %v397 = vmul.f32 %v395, %v179
  %v398 = vmul.f32 %v396, %v183
  %399 = vrot.lane.b32.xlu0 %v349, 112
  %v400 = vpop.permute.xlu0 %399
  %401 = vrot.lane.b32.xlu0 %v350, 112
  %v402 = vpop.permute.xlu0 %401
  %v403 = vsel %vm192, %v400, %v402
  %v404 = vsel %vm192, %v402, %v400
  %v405 = vmul.f32 %v403, %v201
  %v406 = vmul.f32 %v404, %v205
  %407 = vrot.lane.b32.xlu0 %v349, 111
  %v408 = vpop.permute.xlu0 %407
  %409 = vrot.lane.b32.xlu0 %v350, 111
  %v410 = vpop.permute.xlu0 %409
  %v411 = vsel %vm214, %v408, %v410
  %v412 = vsel %vm214, %v410, %v408
  %v413 = vmul.f32 %v411, %v223
  %v414 = vmul.f32 %v412, %v227
  %v415 = vld [vmem:[%s6] sm:$0xff]
  %v416 = vld [vmem:[%s7] sm:$0xff]
  %418 = vset.pattern.permute.xlu0 0
  %419 = vperm.xlu0 %418, %v416
  %v420 = vpop.permute.xlu0 %419
  %v423 = vsel %vm239, %v415, 0
  %425 = vmatprep.subr.mxu0 0.0
  %426 = vmatpush1.msra.mxu0 0.0
  %427 = vmatprep.subr.mxu0 0.0
  %428 = vmatpush1.msra.mxu0 0.0
  %429 = vmatprep.subr.mxu0 0.0
  %430 = vmatpush1.msra.mxu0 0.0
  %431 = vmatprep.subr.mxu0 0.0
  %432 = vmatpush1.msra.mxu0 0.0
  %433 = vmatprep.subr.mxu0 0.0
  %434 = vmatpush1.msra.mxu0 0.0
  %435 = vmatprep.subr.mxu0 0.0
  %436 = vmatpush1.msra.mxu0 0.0
  %437 = vmatprep.subr.mxu0 0.0
  %438 = vmatpush1.msra.mxu0 0.0
  %439 = vmatprep.subr.mxu0 %v414
  %440 = vmatpush1.msra.mxu0 %v413
  %441 = vmatprep.subr.mxu0 %v406
  %442 = vmatpush1.msra.mxu0 %v405
  %443 = vmatprep.subr.mxu0 %v398
  %444 = vmatpush1.msra.mxu0 %v397
  %445 = vmatprep.subr.mxu0 %v390
  %446 = vmatpush1.msra.mxu0 %v389
  %447 = vmatprep.subr.mxu0 %v350
  %448 = vmatpush1.msra.mxu0 %v349
  %449 = vmatprep.subr.mxu0 %v382
  %450 = vmatpush1.msra.mxu0 %v381
  %451 = vmatprep.subr.mxu0 %v374
  %452 = vmatpush1.msra.mxu0 %v373
  %453 = vmatprep.subr.mxu0 %v366
  %454 = vmatpush1.msra.mxu0 %v365
  %455 = vmatprep.subr.mxu0 %v358
  %456 = vmatpush1.msra.mxu0 %v357
  %457 = vmatprep.subr.mxu0 0.0
  %458 = vmatpush2.msra.mxu0 0.0
  %459 = vmatprep.subr.mxu0 0.0
  %460 = vmatpush2.msra.mxu0 0.0
  %461 = vmatprep.subr.mxu0 0.0
  %462 = vmatpush2.msra.mxu0 0.0
  %463 = vmatprep.subr.mxu0 0.0
  %464 = vmatpush2.msra.mxu0 0.0
  %465 = vmatprep.subr.mxu0 0.0
  %466 = vmatpush2.msra.mxu0 0.0
  %467 = vmatprep.subr.mxu0 0.0
  %468 = vmatpush2.msra.mxu0 0.0
  %469 = vmatprep.subr.mxu0 0.0
  %470 = vmatpush2.msra.mxu0 0.0
  %471 = vmatprep.subr.mxu0 0.0
  %472 = vmatpush2.msra.mxu0 0.0
  %473 = vmatprep.subr.mxu0 0.0
  %474 = vmatpush2.msra.mxu0 0.0
  %475 = vmatprep.subr.mxu0 0.0
  %476 = vmatpush2.msra.mxu0 0.0
  %477 = vmatprep.subr.mxu0 0.0
  %478 = vmatpush2.msra.mxu0 0.0
  %479 = vmatprep.subr.mxu0 0.0
  %480 = vmatpush2.msra.mxu0 0.0
  %481 = vmatprep.subr.mxu0 0.0
  %482 = vmatpush2.msra.mxu0 0.0
  %483 = vmatprep.subr.mxu0 0.0
  %484 = vmatpush2.msra.mxu0 0.0
  %485 = vmatprep.subr.mxu0 0.0
  %486 = vmatpush2.msra.mxu0 0.0
  %487 = vmatprep.subr.mxu0 0.0
  %488 = vmatpush2.msra.mxu0 0.0
  %489 = vmatprep.mubr.f32.mxu0 0.0
  %490 = vmatmul.mubr.f32.gmra.mxu0 %v423
  %v491 = vpop.f32.mrf.mxu0
  %v492 = vadd.f32 %v420, %v491
  %v493 = vpop.f32.mrf.mxu0
  %v494 = vadd.f32 %v420, %v493
  %495 = vdwg.mxu0
  %v496 = vadd.f32 %v492, %v494
  %497 = vadd.xlane.f32.xlu0 %v496
  %v498 = vpop.xlane.xlu0 %497
  %v499 = vmul.f32 %v492, %v492
  %v500 = vmul.f32 %v494, %v494
  %v501 = vadd.f32 %v499, %v500
  %502 = vadd.xlane.f32.xlu0 %v501
  %v503 = vpop.xlane.xlu0 %502
  %v504 = vmul.f32 %v498, 0.00390625
  %v505 = vmul.f32 %v503, 0.00390625
  %v506 = vmul.f32 %v504, %v504
  %v507 = vsub.f32 %v505, %v506
  %v508 = vmax.f32 %v507, 0.0
  %v509 = vsub.f32 %v492, %v504
  %v510 = vsub.f32 %v494, %v504
  %v511 = vadd.f32 %v508, 1e-05
  %v512 = vrsqrt.pop %v511
  %v513 = vmul.f32 %v509, %v512
  %v514 = vmul.f32 %v510, %v512
  %v515 = vld [vmem:[%s8] sm:$0xff]
  %517 = vset.pattern.permute.xlu0 0
  %518 = vperm.xlu0 %517, %v515
  %v519 = vpop.permute.xlu0 %518
  %v521 = vmul.f32 %v513, %v519
  %v522 = vmul.f32 %v514, %v519
  %v523 = vld [vmem:[%s9] sm:$0xff]
  %525 = vset.pattern.permute.xlu0 0
  %526 = vperm.xlu0 %525, %v523
  %v527 = vpop.permute.xlu0 %526
  %v529 = vadd.f32 %v521, %v527
  %v530 = vadd.f32 %v522, %v527
  %v531 = vmax.f32 %v529, 0.0
  %v532 = vmax.f32 %v530, 0.0
  %533 = vrot.lane.b32.xlu0 %v531, 17
  %v534 = vpop.permute.xlu0 %533
  %535 = vrot.lane.b32.xlu0 %v532, 17
  %v536 = vpop.permute.xlu0 %535
  %v537 = vsel %vm61, %v534, %v536
  %v538 = vsel %vm61, %v536, %v534
  %v539 = vmul.f32 %v538, %v69
  %v540 = vmul.f32 %v537, %v73
  %541 = vrot.lane.b32.xlu0 %v531, 16
  %v542 = vpop.permute.xlu0 %541
  %543 = vrot.lane.b32.xlu0 %v532, 16
  %v544 = vpop.permute.xlu0 %543
  %v545 = vsel %vm82, %v542, %v544
  %v546 = vsel %vm82, %v544, %v542
  %v547 = vmul.f32 %v546, %v91
  %v548 = vmul.f32 %v545, %v95
  %549 = vrot.lane.b32.xlu0 %v531, 15
  %v550 = vpop.permute.xlu0 %549
  %551 = vrot.lane.b32.xlu0 %v532, 15
  %v552 = vpop.permute.xlu0 %551
  %v553 = vsel %vm104, %v550, %v552
  %v554 = vsel %vm104, %v552, %v550
  %v555 = vmul.f32 %v554, %v113
  %v556 = vmul.f32 %v553, %v117
  %557 = vrot.lane.b32.xlu0 %v531, 1
  %v558 = vpop.permute.xlu0 %557
  %559 = vrot.lane.b32.xlu0 %v532, 1
  %v560 = vpop.permute.xlu0 %559
  %v561 = vsel %vm126, %v558, %v560
  %v562 = vsel %vm126, %v560, %v558
  %v563 = vmul.f32 %v562, %v135
  %v564 = vmul.f32 %v561, %v139
  %565 = vrot.lane.b32.xlu0 %v531, 127
  %v566 = vpop.permute.xlu0 %565
  %567 = vrot.lane.b32.xlu0 %v532, 127
  %v568 = vpop.permute.xlu0 %567
  %v569 = vsel %vm148, %v566, %v568
  %v570 = vsel %vm148, %v568, %v566
  %v571 = vmul.f32 %v569, %v157
  %v572 = vmul.f32 %v570, %v161
  %573 = vrot.lane.b32.xlu0 %v531, 113
  %v574 = vpop.permute.xlu0 %573
  %575 = vrot.lane.b32.xlu0 %v532, 113
  %v576 = vpop.permute.xlu0 %575
  %v577 = vsel %vm170, %v574, %v576
  %v578 = vsel %vm170, %v576, %v574
  %v579 = vmul.f32 %v577, %v179
  %v580 = vmul.f32 %v578, %v183
  %581 = vrot.lane.b32.xlu0 %v531, 112
  %v582 = vpop.permute.xlu0 %581
  %583 = vrot.lane.b32.xlu0 %v532, 112
  %v584 = vpop.permute.xlu0 %583
  %v585 = vsel %vm192, %v582, %v584
  %v586 = vsel %vm192, %v584, %v582
  %v587 = vmul.f32 %v585, %v201
  %v588 = vmul.f32 %v586, %v205
  %589 = vrot.lane.b32.xlu0 %v531, 111
  %v590 = vpop.permute.xlu0 %589
  %591 = vrot.lane.b32.xlu0 %v532, 111
  %v592 = vpop.permute.xlu0 %591
  %v593 = vsel %vm214, %v590, %v592
  %v594 = vsel %vm214, %v592, %v590
  %v595 = vmul.f32 %v593, %v223
  %v596 = vmul.f32 %v594, %v227
  %v597 = vld [vmem:[%s10] sm:$0xff]
  %v598 = vld [vmem:[%s10 + $0x8] sm:$0xff]
  %v599 = vld [vmem:[%s11] sm:$0xff]
  %v600 = vld [vmem:[%s11 + $0x8] sm:$0xff]
  %602 = vset.pattern.permute.xlu0 0
  %603 = vperm.xlu0 %602, %v599
  %v604 = vpop.permute.xlu0 %603
  %607 = vset.pattern.permute.xlu0 0
  %608 = vperm.xlu0 %607, %v600
  %v609 = vpop.permute.xlu0 %608
  %v612 = vsel %vm239, %v597, 0
  %v615 = vsel %vm239, %v598, 0
  %617 = vmatprep.subr.mxu0 0.0
  %618 = vmatpush1.msra.mxu0 0.0
  %619 = vmatprep.subr.mxu0 0.0
  %620 = vmatpush1.msra.mxu0 0.0
  %621 = vmatprep.subr.mxu0 0.0
  %622 = vmatpush1.msra.mxu0 0.0
  %623 = vmatprep.subr.mxu0 0.0
  %624 = vmatpush1.msra.mxu0 0.0
  %625 = vmatprep.subr.mxu0 0.0
  %626 = vmatpush1.msra.mxu0 0.0
  %627 = vmatprep.subr.mxu0 0.0
  %628 = vmatpush1.msra.mxu0 0.0
  %629 = vmatprep.subr.mxu0 0.0
  %630 = vmatpush1.msra.mxu0 0.0
  %631 = vmatprep.subr.mxu0 %v596
  %632 = vmatpush1.msra.mxu0 %v595
  %633 = vmatprep.subr.mxu0 %v588
  %634 = vmatpush1.msra.mxu0 %v587
  %635 = vmatprep.subr.mxu0 %v580
  %636 = vmatpush1.msra.mxu0 %v579
  %637 = vmatprep.subr.mxu0 %v572
  %638 = vmatpush1.msra.mxu0 %v571
  %639 = vmatprep.subr.mxu0 %v532
  %640 = vmatpush1.msra.mxu0 %v531
  %641 = vmatprep.subr.mxu0 %v564
  %642 = vmatpush1.msra.mxu0 %v563
  %643 = vmatprep.subr.mxu0 %v556
  %644 = vmatpush1.msra.mxu0 %v555
  %645 = vmatprep.subr.mxu0 %v548
  %646 = vmatpush1.msra.mxu0 %v547
  %647 = vmatprep.subr.mxu0 %v540
  %648 = vmatpush1.msra.mxu0 %v539
  %649 = vmatprep.subr.mxu0 0.0
  %650 = vmatpush2.msra.mxu0 0.0
  %651 = vmatprep.subr.mxu0 0.0
  %652 = vmatpush2.msra.mxu0 0.0
  %653 = vmatprep.subr.mxu0 0.0
  %654 = vmatpush2.msra.mxu0 0.0
  %655 = vmatprep.subr.mxu0 0.0
  %656 = vmatpush2.msra.mxu0 0.0
  %657 = vmatprep.subr.mxu0 0.0
  %658 = vmatpush2.msra.mxu0 0.0
  %659 = vmatprep.subr.mxu0 0.0
  %660 = vmatpush2.msra.mxu0 0.0
  %661 = vmatprep.subr.mxu0 0.0
  %662 = vmatpush2.msra.mxu0 0.0
  %663 = vmatprep.subr.mxu0 0.0
  %664 = vmatpush2.msra.mxu0 0.0
  %665 = vmatprep.subr.mxu0 0.0
  %666 = vmatpush2.msra.mxu0 0.0
  %667 = vmatprep.subr.mxu0 0.0
  %668 = vmatpush2.msra.mxu0 0.0
  %669 = vmatprep.subr.mxu0 0.0
  %670 = vmatpush2.msra.mxu0 0.0
  %671 = vmatprep.subr.mxu0 0.0
  %672 = vmatpush2.msra.mxu0 0.0
  %673 = vmatprep.subr.mxu0 0.0
  %674 = vmatpush2.msra.mxu0 0.0
  %675 = vmatprep.subr.mxu0 0.0
  %676 = vmatpush2.msra.mxu0 0.0
  %677 = vmatprep.subr.mxu0 0.0
  %678 = vmatpush2.msra.mxu0 0.0
  %679 = vmatprep.subr.mxu0 0.0
  %680 = vmatpush2.msra.mxu0 0.0
  %681 = vmatprep.mubr.f32.mxu0 0.0
  %682 = vmatmul.mubr.f32.gmra.mxu0 %v612
  %v683 = vpop.f32.mrf.mxu0
  %v684 = vadd.f32 %v604, %v683
  %v685 = vpop.f32.mrf.mxu0
  %v686 = vadd.f32 %v604, %v685
  %687 = vmatprep.mubr.f32.mxu0 0.0
  %688 = vmatmul.mubr.f32.gmra.mxu0 %v615
  %v689 = vpop.f32.mrf.mxu0
  %v690 = vadd.f32 %v609, %v689
  %v691 = vpop.f32.mrf.mxu0
  %v692 = vadd.f32 %v609, %v691
  %693 = vdwg.mxu0
  %v694 = vadd.f32 %v684, %v686
  %695 = vadd.xlane.f32.xlu0 %v694
  %v696 = vpop.xlane.xlu0 %695
  %v697 = vadd.f32 %v690, %v692
  %698 = vadd.xlane.f32.xlu0 %v697
  %v699 = vpop.xlane.xlu0 %698
  %v700 = vmul.f32 %v684, %v684
  %v701 = vmul.f32 %v686, %v686
  %v702 = vmul.f32 %v690, %v690
  %v703 = vmul.f32 %v692, %v692
  %v704 = vadd.f32 %v700, %v701
  %705 = vadd.xlane.f32.xlu0 %v704
  %v706 = vpop.xlane.xlu0 %705
  %v707 = vadd.f32 %v702, %v703
  %708 = vadd.xlane.f32.xlu0 %v707
  %v709 = vpop.xlane.xlu0 %708
  %v710 = vmul.f32 %v696, 0.00390625
  %v711 = vmul.f32 %v699, 0.00390625
  %v712 = vmul.f32 %v706, 0.00390625
  %v713 = vmul.f32 %v709, 0.00390625
  %v714 = vmul.f32 %v710, %v710
  %v715 = vmul.f32 %v711, %v711
  %v716 = vsub.f32 %v712, %v714
  %v717 = vsub.f32 %v713, %v715
  %v718 = vmax.f32 %v716, 0.0
  %v719 = vmax.f32 %v717, 0.0
  %v720 = vsub.f32 %v684, %v710
  %v721 = vsub.f32 %v686, %v710
  %v722 = vsub.f32 %v690, %v711
  %v723 = vsub.f32 %v692, %v711
  %v724 = vadd.f32 %v718, 1e-05
  %v725 = vadd.f32 %v719, 1e-05
  %v726 = vrsqrt.pop %v724
  %v727 = vrsqrt.pop %v725
  %v728 = vmul.f32 %v720, %v726
  %v729 = vmul.f32 %v721, %v726
  %v730 = vmul.f32 %v722, %v727
  %v731 = vmul.f32 %v723, %v727
  %v732 = vld [vmem:[%s12] sm:$0xff]
  %v733 = vld [vmem:[%s12 + $0x8] sm:$0xff]
  %735 = vset.pattern.permute.xlu0 0
  %736 = vperm.xlu0 %735, %v732
  %v737 = vpop.permute.xlu0 %736
  %740 = vset.pattern.permute.xlu0 0
  %741 = vperm.xlu0 %740, %v733
  %v742 = vpop.permute.xlu0 %741
  %v744 = vmul.f32 %v728, %v737
  %v745 = vmul.f32 %v729, %v737
  %v746 = vmul.f32 %v730, %v742
  %v747 = vmul.f32 %v731, %v742
  %v748 = vld [vmem:[%s13] sm:$0xff]
  %v749 = vld [vmem:[%s13 + $0x8] sm:$0xff]
  %751 = vset.pattern.permute.xlu0 0
  %752 = vperm.xlu0 %751, %v748
  %v753 = vpop.permute.xlu0 %752
  %756 = vset.pattern.permute.xlu0 0
  %757 = vperm.xlu0 %756, %v749
  %v758 = vpop.permute.xlu0 %757
  %v760 = vadd.f32 %v744, %v753
  %v761 = vadd.f32 %v745, %v753
  %v762 = vadd.f32 %v746, %v758
  %v763 = vadd.f32 %v747, %v758
  %v764 = vmax.f32 %v760, 0.0
  %v765 = vmax.f32 %v761, 0.0
  %v766 = vmax.f32 %v762, 0.0
  %v767 = vmax.f32 %v763, 0.0
  %768 = vrot.lane.b32.xlu0 %v764, 17
  %v769 = vpop.permute.xlu0 %768
  %770 = vrot.lane.b32.xlu0 %v766, 17
  %v771 = vpop.permute.xlu0 %770
  %772 = vrot.lane.b32.xlu0 %v765, 17
  %v773 = vpop.permute.xlu0 %772
  %774 = vrot.lane.b32.xlu0 %v767, 17
  %v775 = vpop.permute.xlu0 %774
  %v776 = vsel %vm61, %v769, %v773
  %v777 = vsel %vm61, %v771, %v775
  %v778 = vsel %vm61, %v773, %v769
  %v779 = vsel %vm61, %v775, %v771
  %v780 = vmul.f32 %v778, %v69
  %v781 = vmul.f32 %v776, %v73
  %v782 = vmul.f32 %v779, %v69
  %v783 = vmul.f32 %v777, %v73
  %784 = vrot.lane.b32.xlu0 %v764, 16
  %v785 = vpop.permute.xlu0 %784
  %786 = vrot.lane.b32.xlu0 %v766, 16
  %v787 = vpop.permute.xlu0 %786
  %788 = vrot.lane.b32.xlu0 %v765, 16
  %v789 = vpop.permute.xlu0 %788
  %790 = vrot.lane.b32.xlu0 %v767, 16
  %v791 = vpop.permute.xlu0 %790
  %v792 = vsel %vm82, %v785, %v789
  %v793 = vsel %vm82, %v787, %v791
  %v794 = vsel %vm82, %v789, %v785
  %v795 = vsel %vm82, %v791, %v787
  %v796 = vmul.f32 %v794, %v91
  %v797 = vmul.f32 %v792, %v95
  %v798 = vmul.f32 %v795, %v91
  %v799 = vmul.f32 %v793, %v95
  %800 = vrot.lane.b32.xlu0 %v764, 15
  %v801 = vpop.permute.xlu0 %800
  %802 = vrot.lane.b32.xlu0 %v766, 15
  %v803 = vpop.permute.xlu0 %802
  %804 = vrot.lane.b32.xlu0 %v765, 15
  %v805 = vpop.permute.xlu0 %804
  %806 = vrot.lane.b32.xlu0 %v767, 15
  %v807 = vpop.permute.xlu0 %806
  %v808 = vsel %vm104, %v801, %v805
  %v809 = vsel %vm104, %v803, %v807
  %v810 = vsel %vm104, %v805, %v801
  %v811 = vsel %vm104, %v807, %v803
  %v812 = vmul.f32 %v810, %v113
  %v813 = vmul.f32 %v808, %v117
  %v814 = vmul.f32 %v811, %v113
  %v815 = vmul.f32 %v809, %v117
  %816 = vrot.lane.b32.xlu0 %v764, 1
  %v817 = vpop.permute.xlu0 %816
  %818 = vrot.lane.b32.xlu0 %v766, 1
  %v819 = vpop.permute.xlu0 %818
  %820 = vrot.lane.b32.xlu0 %v765, 1
  %v821 = vpop.permute.xlu0 %820
  %822 = vrot.lane.b32.xlu0 %v767, 1
  %v823 = vpop.permute.xlu0 %822
  %v824 = vsel %vm126, %v817, %v821
  %v825 = vsel %vm126, %v819, %v823
  %v826 = vsel %vm126, %v821, %v817
  %v827 = vsel %vm126, %v823, %v819
  %v828 = vmul.f32 %v826, %v135
  %v829 = vmul.f32 %v824, %v139
  %v830 = vmul.f32 %v827, %v135
  %v831 = vmul.f32 %v825, %v139
  %832 = vrot.lane.b32.xlu0 %v764, 127
  %v833 = vpop.permute.xlu0 %832
  %834 = vrot.lane.b32.xlu0 %v766, 127
  %v835 = vpop.permute.xlu0 %834
  %836 = vrot.lane.b32.xlu0 %v765, 127
  %v837 = vpop.permute.xlu0 %836
  %838 = vrot.lane.b32.xlu0 %v767, 127
  %v839 = vpop.permute.xlu0 %838
  %v840 = vsel %vm148, %v833, %v837
  %v841 = vsel %vm148, %v835, %v839
  %v842 = vsel %vm148, %v837, %v833
  %v843 = vsel %vm148, %v839, %v835
  %v844 = vmul.f32 %v840, %v157
  %v845 = vmul.f32 %v842, %v161
  %v846 = vmul.f32 %v841, %v157
  %v847 = vmul.f32 %v843, %v161
  %848 = vrot.lane.b32.xlu0 %v764, 113
  %v849 = vpop.permute.xlu0 %848
  %850 = vrot.lane.b32.xlu0 %v766, 113
  %v851 = vpop.permute.xlu0 %850
  %852 = vrot.lane.b32.xlu0 %v765, 113
  %v853 = vpop.permute.xlu0 %852
  %854 = vrot.lane.b32.xlu0 %v767, 113
  %v855 = vpop.permute.xlu0 %854
  %v856 = vsel %vm170, %v849, %v853
  %v857 = vsel %vm170, %v851, %v855
  %v858 = vsel %vm170, %v853, %v849
  %v859 = vsel %vm170, %v855, %v851
  %v860 = vmul.f32 %v856, %v179
  %v861 = vmul.f32 %v858, %v183
  %v862 = vmul.f32 %v857, %v179
  %v863 = vmul.f32 %v859, %v183
  %864 = vrot.lane.b32.xlu0 %v764, 112
  %v865 = vpop.permute.xlu0 %864
  %866 = vrot.lane.b32.xlu0 %v766, 112
  %v867 = vpop.permute.xlu0 %866
  %868 = vrot.lane.b32.xlu0 %v765, 112
  %v869 = vpop.permute.xlu0 %868
  %870 = vrot.lane.b32.xlu0 %v767, 112
  %v871 = vpop.permute.xlu0 %870
  %v872 = vsel %vm192, %v865, %v869
  %v873 = vsel %vm192, %v867, %v871
  %v874 = vsel %vm192, %v869, %v865
  %v875 = vsel %vm192, %v871, %v867
  %v876 = vmul.f32 %v872, %v201
  %v877 = vmul.f32 %v874, %v205
  %v878 = vmul.f32 %v873, %v201
  %v879 = vmul.f32 %v875, %v205
  %880 = vrot.lane.b32.xlu0 %v764, 111
  %v881 = vpop.permute.xlu0 %880
  %882 = vrot.lane.b32.xlu0 %v766, 111
  %v883 = vpop.permute.xlu0 %882
  %884 = vrot.lane.b32.xlu0 %v765, 111
  %v885 = vpop.permute.xlu0 %884
  %886 = vrot.lane.b32.xlu0 %v767, 111
  %v887 = vpop.permute.xlu0 %886
  %v888 = vsel %vm214, %v881, %v885
  %v889 = vsel %vm214, %v883, %v887
  %v890 = vsel %vm214, %v885, %v881
  %v891 = vsel %vm214, %v887, %v883
  %v892 = vmul.f32 %v888, %v223
  %v893 = vmul.f32 %v890, %v227
  %v894 = vmul.f32 %v889, %v223
  %v895 = vmul.f32 %v891, %v227
  %v896 = vld [vmem:[%s14] sm:$0xff]
  %v897 = vld [vmem:[%s14 + $0x8] sm:$0xff]
  %v898 = vld [vmem:[%s15] sm:$0xff]
  %900 = vset.pattern.permute.xlu0 0
  %901 = vperm.xlu0 %900, %v898
  %v902 = vpop.permute.xlu0 %901
  %vm904 = vcmask 130048
  %v906 = vsel %vm904, %v897, 0
  %908 = vmatprep.subr.mxu0 %v879
  %909 = vmatpush1.msra.mxu0 %v878
  %910 = vmatprep.subr.mxu0 %v877
  %911 = vmatpush1.msra.mxu0 %v876
  %912 = vmatprep.subr.mxu0 %v863
  %913 = vmatpush1.msra.mxu0 %v862
  %914 = vmatprep.subr.mxu0 %v861
  %915 = vmatpush1.msra.mxu0 %v860
  %916 = vmatprep.subr.mxu0 %v847
  %917 = vmatpush1.msra.mxu0 %v846
  %918 = vmatprep.subr.mxu0 %v845
  %919 = vmatpush1.msra.mxu0 %v844
  %920 = vmatprep.subr.mxu0 %v767
  %921 = vmatpush1.msra.mxu0 %v766
  %922 = vmatprep.subr.mxu0 %v765
  %923 = vmatpush1.msra.mxu0 %v764
  %924 = vmatprep.subr.mxu0 %v831
  %925 = vmatpush1.msra.mxu0 %v830
  %926 = vmatprep.subr.mxu0 %v829
  %927 = vmatpush1.msra.mxu0 %v828
  %928 = vmatprep.subr.mxu0 %v815
  %929 = vmatpush1.msra.mxu0 %v814
  %930 = vmatprep.subr.mxu0 %v813
  %931 = vmatpush1.msra.mxu0 %v812
  %932 = vmatprep.subr.mxu0 %v799
  %933 = vmatpush1.msra.mxu0 %v798
  %934 = vmatprep.subr.mxu0 %v797
  %935 = vmatpush1.msra.mxu0 %v796
  %936 = vmatprep.subr.mxu0 %v783
  %937 = vmatpush1.msra.mxu0 %v782
  %938 = vmatprep.subr.mxu0 %v781
  %939 = vmatpush1.msra.mxu0 %v780
  %940 = vmatprep.subr.mxu0 0.0
  %941 = vmatpush2.msra.mxu0 0.0
  %942 = vmatprep.subr.mxu0 0.0
  %943 = vmatpush2.msra.mxu0 0.0
  %944 = vmatprep.subr.mxu0 0.0
  %945 = vmatpush2.msra.mxu0 0.0
  %946 = vmatprep.subr.mxu0 0.0
  %947 = vmatpush2.msra.mxu0 0.0
  %948 = vmatprep.subr.mxu0 0.0
  %949 = vmatpush2.msra.mxu0 0.0
  %950 = vmatprep.subr.mxu0 0.0
  %951 = vmatpush2.msra.mxu0 0.0
  %952 = vmatprep.subr.mxu0 0.0
  %953 = vmatpush2.msra.mxu0 0.0
  %954 = vmatprep.subr.mxu0 0.0
  %955 = vmatpush2.msra.mxu0 0.0
  %956 = vmatprep.subr.mxu0 0.0
  %957 = vmatpush2.msra.mxu0 0.0
  %958 = vmatprep.subr.mxu0 0.0
  %959 = vmatpush2.msra.mxu0 0.0
  %960 = vmatprep.subr.mxu0 0.0
  %961 = vmatpush2.msra.mxu0 0.0
  %962 = vmatprep.subr.mxu0 0.0
  %963 = vmatpush2.msra.mxu0 0.0
  %964 = vmatprep.subr.mxu0 0.0
  %965 = vmatpush2.msra.mxu0 0.0
  %966 = vmatprep.subr.mxu0 0.0
  %967 = vmatpush2.msra.mxu0 0.0
  %968 = vmatprep.subr.mxu0 %v895
  %969 = vmatpush2.msra.mxu0 %v894
  %970 = vmatprep.subr.mxu0 %v893
  %971 = vmatpush2.msra.mxu0 %v892
  %972 = vmatprep.mubr.f32.mxu0 %v906
  %973 = vmatmul.mubr.f32.gmra.mxu0 %v896
  %v974 = vpop.f32.mrf.mxu0
  %v975 = vadd.f32 %v902, %v974
  %v976 = vpop.f32.mrf.mxu0
  %v977 = vadd.f32 %v902, %v976
  %978 = vdwg.mxu0
  %979 = vst [vmem:[%s16] sm:$0xff] %v975
  %980 = vst [vmem:[%s16 + $0x8] sm:$0xff] %v977
  // Predicated region
  $region66: #{net1_forward.1} parent=0 // pred_check
    _
  $region67: #{net1_forward.1} parent=0 // pred_check_branch
    %982 = sbr.rel (0) target = $region69
  $region68: #{net1_forward.1} parent=0 // pred_region
    _
  $region69: #{net1_forward.1} parent=0 // pred_fallthru
    _
  // Predicated region
  $region70: #{net1_forward.1} parent=0 // pred_check
    _
  $region71: #{net1_forward.1} parent=0 // pred_check_branch
    %984 = sbr.rel (0) target = $region73
  $region72: #{net1_forward.1} parent=0 // pred_region
    _
  $region73: #{net1_forward.1} parent=0 // pred_fallthru
    _

</llo_original>
